<compile_context>
chip_gen: v7x
topology: tpu7x:2x2x1
jax: 0.10.0
libtpu: 0.0.40
codegen_flags: <defaults>
</compile_context>

<pallas_src>
import jax
import jax.numpy as jnp
from jax.experimental import pallas as pl
from jax.experimental.pallas import tpu as pltpu

_LANE = 128


def _make_pinn_kernel(num_hidden):
    """Kernel for a given depth (num_hidden = DEEPu - 1 tanh hidden layers)."""

    def kernel(coords_ref, w_in_ref, b_in_ref, *rest):
        # rest = (W1, b1, ..., Wk, bk, W_out, b_out, out_ref)
        out_ref = rest[-1]
        w_out_ref = rest[-3]
        b_out_ref = rest[-2]
        hidden_refs = rest[: 2 * num_hidden]

        xv = coords_ref[0:1, :]              # (1, TB) angle
        tv = coords_ref[1:2, :]              # (1, TB) time

        # Input layer: x0 = [cos(x), sin(x), t] lifted by W_in (H, 3).
        # Implemented as three VPU broadcast multiply-adds (K=3 matmul avoided).
        w_in = w_in_ref[...]                 # (H, 3)
        h = jnp.tanh(
            w_in[:, 0:1] * jnp.cos(xv)
            + w_in[:, 1:2] * jnp.sin(xv)
            + w_in[:, 2:3] * tv
            + b_in_ref[...]                  # (H, 1) broadcast over lanes
        )                                    # (H, TB)

        # Hidden tanh layers (feature-major: W @ h + b).
        for k in range(num_hidden):
            w = hidden_refs[2 * k][...]      # (H, H)
            b = hidden_refs[2 * k + 1][...]  # (H, 1)
            h = jnp.tanh(
                jnp.dot(w, h, preferred_element_type=jnp.float32) + b
            )

        # Output layer (no activation): (1, H) @ (H, TB) -> (1, TB)
        u = jnp.dot(w_out_ref[...], h, preferred_element_type=jnp.float32) + b_out_ref[...]
        out_ref[...] = u.astype(out_ref.dtype)

    return kernel


def pinn_polar_forward(x, t, params, *, deep_u, tile_b=512):
    """Pallas implementation of PINN_POLAR.forward(x, t, xx, tt) -> (u, 0).

    x, t   : (B, 1) float32 collocation-point coordinates (PyTorch layout).
    params : dict with PyTorch-layout weights
      'input'  : (W (H, 3),  b (H, 1))
      'hidden1'...'hidden5' : (W (H, H), b (H, 1))
      'output' : (W (1, H),  b (1, 1))
    """
    B = x.shape[0]
    num_hidden = deep_u - 1  # DEEPu=3 -> hidden1,hidden2 ; DEEPu=6 -> hidden1..5
    assert 2 <= num_hidden <= 5

    # --- choose lane tile: multiple of 128, large, but keep grid >= 2 if possible ---
    tile_b = max(_LANE, (int(tile_b) // _LANE) * _LANE)
    tile_b = min(tile_b, max(_LANE, pl.cdiv(B, 2 * _LANE) * _LANE))
    b_pad = pl.cdiv(B, tile_b) * tile_b
    grid = (b_pad // tile_b,)

    # --- pack coords lane-dense: (2, B_pad), row 0 = x, row 1 = t ---
    coords = jnp.concatenate(
        [x.reshape(1, -1), t.reshape(1, -1)], axis=0
    ).astype(jnp.float32)
    if b_pad != B:
        coords = jnp.pad(coords, ((0, 0), (0, b_pad - B)))

    kernel = _make_pinn_kernel(num_hidden)

    # Flat argument list: coords, W_in, b_in, (W_h, b_h)*num_hidden, W_out, b_out
    args = [coords, params["input"][0], params["input"][1]]
    for k in range(num_hidden):
        w, b = params[f"hidden{k + 1}"]
        args += [w, b]
    args += [params["output"][0], params["output"][1]]

    def full_spec(arr):
        # Small weight/bias arrays: whole array, block-index-invariant
        # (same block every grid step -> stays resident, no re-DMA).
        return pl.BlockSpec(arr.shape, lambda i: (0,) * arr.ndim)

    in_specs = [
        pl.BlockSpec((2, tile_b), lambda i: (0, i)),   # packed coords
    ] + [full_spec(a) for a in args[1:]]

    out_spec = pl.BlockSpec((1, tile_b), lambda i: (0, i))

    u = pl.pallas_call(
        kernel,
        out_shape=jax.ShapeDtypeStruct((1, b_pad), jnp.float32),
        grid=grid,
        in_specs=in_specs,
        out_specs=out_spec,
        compiler_params=pltpu.CompilerParams(
            dimension_semantics=("parallel",)
        ),
    )(*args)

    u = u[:, :B].reshape(B, 1)
    # forward() returns (u, 0): the xL path is unused in this module.
    return u, 0


def init_params(key, hidden):
    """Deterministic PyTorch-Linear-like init, PyTorch layout: W (out, in), b (out, 1)."""
    def linear(key, fan_in, fan_out):
        kw, kb = jax.random.split(key)
        bound = 1.0 / jnp.sqrt(jnp.float32(fan_in))
        w = jax.random.uniform(kw, (fan_out, fan_in), jnp.float32, -bound, bound)
        b = jax.random.uniform(kb, (fan_out, 1), jnp.float32, -bound, bound)
        return w, b

    keys = jax.random.split(key, 7)
    params = {
        "input": linear(keys[0], 3, hidden),
        "hidden1": linear(keys[1], hidden, hidden),
        "hidden2": linear(keys[2], hidden, hidden),
        "hidden3": linear(keys[3], hidden, hidden),
        "hidden4": linear(keys[4], hidden, hidden),
        "hidden5": linear(keys[5], hidden, hidden),
        "output": linear(keys[6], hidden, 1),
    }
    return params


def reference_forward(x, t, params, deep_u):
    """Pure-JAX reference of the same forward pass (for verification)."""
    x0 = jnp.concatenate([jnp.cos(x), jnp.sin(x), t], axis=1)   # (B, 3)
    w, b = params["input"]
    h = jnp.tanh(x0 @ w.T + b.T)
    for k in range(deep_u - 1):
        w, b = params[f"hidden{k + 1}"]
        h = jnp.tanh(h @ w.T + b.T)
    w, b = params["output"]
    return h @ w.T + b.T


if __name__ == "__main__":
    # N spatial points x M time slices, flattened into B = N*M collocation
    # points of shape (B, 1) — matches the module's usage.
    N, M = 16, 16
    B = N * M                  # 256 -> tile_b adapts to 128, grid = 2
    HIDDEN = 32
    DEEPU = 5                  # uses hidden1..hidden4; hidden5 exists but unused

    key = jax.random.PRNGKey(0)
    kp, kx, kt = jax.random.split(key, 3)
    params = init_params(kp, HIDDEN)

    x = jax.random.uniform(kx, (B, 1), jnp.float32, 0.0, 2.0 * jnp.pi)
    t = jax.random.uniform(kt, (B, 1), jnp.float32, 0.0, 1.0)

    u, xL = pinn_polar_forward(x, t, params, deep_u=DEEPU)
    u = jax.block_until_ready(u)

    u_ref = reference_forward(x, t, params, DEEPU)
    assert u.shape == (B, 1)
    assert jnp.allclose(u, u_ref, atol=1e-5, rtol=1e-5), (
        float(jnp.max(jnp.abs(u - u_ref)))
    )

    # TODO(synk): net_residual/lib need u_x, u_xx, u_t — those are autodiff of
    # this forward (use jax.grad / jax.jacfwd on the wrapper), not a separate kernel.

    print("KERNEL_OK")
</pallas_src>

<mosaic_0001>
module attributes {stable_mosaic.version = 11 : i64} {
  func.func @kernel(%arg0: i32, %arg1: memref<2x128xf32, #tpu.memory_space<vmem>>, %arg2: memref<32x3xf32, #tpu.memory_space<vmem>>, %arg3: memref<32x1xf32, #tpu.memory_space<vmem>>, %arg4: memref<32x32xf32, #tpu.memory_space<vmem>>, %arg5: memref<32x1xf32, #tpu.memory_space<vmem>>, %arg6: memref<32x32xf32, #tpu.memory_space<vmem>>, %arg7: memref<32x1xf32, #tpu.memory_space<vmem>>, %arg8: memref<32x32xf32, #tpu.memory_space<vmem>>, %arg9: memref<32x1xf32, #tpu.memory_space<vmem>>, %arg10: memref<32x32xf32, #tpu.memory_space<vmem>>, %arg11: memref<32x1xf32, #tpu.memory_space<vmem>>, %arg12: memref<1x32xf32, #tpu.memory_space<vmem>>, %arg13: memref<1x1xf32, #tpu.memory_space<vmem>>, %arg14: memref<1x128xf32, #tpu.memory_space<vmem>>) attributes {dimension_semantics = [#tpu.dimension_semantics<parallel>], iteration_bounds = array<i64: 2>, scalar_prefetch = 0 : i64, scratch_operands = 0 : i64, tpu.core_type = #tpu.core_type<tc>, window_params = [{transform_indices = @transform_0, window_bounds = array<i64: 2, 128>}, {pipeline_mode = #tpu.pipeline_mode<synchronous>, transform_indices = @transform_1, window_bounds = array<i64: 32, 3>}, {pipeline_mode = #tpu.pipeline_mode<synchronous>, transform_indices = @transform_2, window_bounds = array<i64: 32, 1>}, {pipeline_mode = #tpu.pipeline_mode<synchronous>, transform_indices = @transform_3, window_bounds = array<i64: 32, 32>}, {pipeline_mode = #tpu.pipeline_mode<synchronous>, transform_indices = @transform_4, window_bounds = array<i64: 32, 1>}, {pipeline_mode = #tpu.pipeline_mode<synchronous>, transform_indices = @transform_5, window_bounds = array<i64: 32, 32>}, {pipeline_mode = #tpu.pipeline_mode<synchronous>, transform_indices = @transform_6, window_bounds = array<i64: 32, 1>}, {pipeline_mode = #tpu.pipeline_mode<synchronous>, transform_indices = @transform_7, window_bounds = array<i64: 32, 32>}, {pipeline_mode = #tpu.pipeline_mode<synchronous>, transform_indices = @transform_8, window_bounds = array<i64: 32, 1>}, {pipeline_mode = #tpu.pipeline_mode<synchronous>, transform_indices = @transform_9, window_bounds = array<i64: 32, 32>}, {pipeline_mode = #tpu.pipeline_mode<synchronous>, transform_indices = @transform_10, window_bounds = array<i64: 32, 1>}, {pipeline_mode = #tpu.pipeline_mode<synchronous>, transform_indices = @transform_11, window_bounds = array<i64: 1, 32>}, {pipeline_mode = #tpu.pipeline_mode<synchronous>, transform_indices = @transform_12, window_bounds = array<i64: 1, 1>}, {transform_indices = @transform_13, window_bounds = array<i64: 1, 128>}]} {
    %c0 = arith.constant 0 : index
    %c0_0 = arith.constant 0 : index
    %0 = vector.load %arg1[%c0, %c0_0] : memref<2x128xf32, #tpu.memory_space<vmem>>, vector<1x128xf32>
    %c1 = arith.constant 1 : index
    %c0_1 = arith.constant 0 : index
    %1 = vector.load %arg1[%c1, %c0_1] : memref<2x128xf32, #tpu.memory_space<vmem>>, vector<1x128xf32>
    %c0_2 = arith.constant 0 : index
    %c0_3 = arith.constant 0 : index
    %2 = vector.load %arg2[%c0_2, %c0_3] : memref<32x3xf32, #tpu.memory_space<vmem>>, vector<32x3xf32>
    %3 = vector.extract_strided_slice %2 {offsets = [0, 0], sizes = [32, 1], strides = [1, 1]} : vector<32x3xf32> to vector<32x1xf32>
    %4 = math.cos %0 : vector<1x128xf32>
    %5 = vector.broadcast %3 : vector<32x1xf32> to vector<32x128xf32>
    %6 = vector.broadcast %4 : vector<1x128xf32> to vector<32x128xf32>
    %7 = arith.mulf %5, %6 : vector<32x128xf32>
    %8 = vector.extract_strided_slice %2 {offsets = [0, 1], sizes = [32, 1], strides = [1, 1]} : vector<32x3xf32> to vector<32x1xf32>
    %9 = math.sin %0 : vector<1x128xf32>
    %10 = vector.broadcast %8 : vector<32x1xf32> to vector<32x128xf32>
    %11 = vector.broadcast %9 : vector<1x128xf32> to vector<32x128xf32>
    %12 = arith.mulf %10, %11 : vector<32x128xf32>
    %13 = arith.addf %7, %12 : vector<32x128xf32>
    %14 = vector.extract_strided_slice %2 {offsets = [0, 2], sizes = [32, 1], strides = [1, 1]} : vector<32x3xf32> to vector<32x1xf32>
    %15 = vector.broadcast %14 : vector<32x1xf32> to vector<32x128xf32>
    %16 = vector.broadcast %1 : vector<1x128xf32> to vector<32x128xf32>
    %17 = arith.mulf %15, %16 : vector<32x128xf32>
    %18 = arith.addf %13, %17 : vector<32x128xf32>
    %c0_4 = arith.constant 0 : index
    %c0_5 = arith.constant 0 : index
    %19 = vector.load %arg3[%c0_4, %c0_5] : memref<32x1xf32, #tpu.memory_space<vmem>>, vector<32x1xf32>
    %20 = vector.broadcast %19 : vector<32x1xf32> to vector<32x128xf32>
    %21 = arith.addf %18, %20 : vector<32x128xf32>
    %22 = math.tanh %21 : vector<32x128xf32>
    %c0_6 = arith.constant 0 : index
    %c0_7 = arith.constant 0 : index
    %23 = vector.load %arg4[%c0_6, %c0_7] : memref<32x32xf32, #tpu.memory_space<vmem>>, vector<32x32xf32>
    %c0_8 = arith.constant 0 : index
    %c0_9 = arith.constant 0 : index
    %24 = vector.load %arg5[%c0_8, %c0_9] : memref<32x1xf32, #tpu.memory_space<vmem>>, vector<32x1xf32>
    %cst = arith.constant dense<0.000000e+00> : vector<32x128xf32>
    %25 = tpu.matmul %23, %22, %cst {dimension_numbers = #tpu.dot_dimension_numbers<[1], [0], [0], [1], [0, 0, 1, 1], [], []>} : vector<32x32xf32>, vector<32x128xf32>, vector<32x128xf32> -> vector<32x128xf32>
    %26 = vector.broadcast %24 : vector<32x1xf32> to vector<32x128xf32>
    %27 = arith.addf %25, %26 : vector<32x128xf32>
    %28 = math.tanh %27 : vector<32x128xf32>
    %c0_10 = arith.constant 0 : index
    %c0_11 = arith.constant 0 : index
    %29 = vector.load %arg6[%c0_10, %c0_11] : memref<32x32xf32, #tpu.memory_space<vmem>>, vector<32x32xf32>
    %c0_12 = arith.constant 0 : index
    %c0_13 = arith.constant 0 : index
    %30 = vector.load %arg7[%c0_12, %c0_13] : memref<32x1xf32, #tpu.memory_space<vmem>>, vector<32x1xf32>
    %cst_14 = arith.constant dense<0.000000e+00> : vector<32x128xf32>
    %31 = tpu.matmul %29, %28, %cst_14 {dimension_numbers = #tpu.dot_dimension_numbers<[1], [0], [0], [1], [0, 0, 1, 1], [], []>} : vector<32x32xf32>, vector<32x128xf32>, vector<32x128xf32> -> vector<32x128xf32>
    %32 = vector.broadcast %30 : vector<32x1xf32> to vector<32x128xf32>
    %33 = arith.addf %31, %32 : vector<32x128xf32>
    %34 = math.tanh %33 : vector<32x128xf32>
    %c0_15 = arith.constant 0 : index
    %c0_16 = arith.constant 0 : index
    %35 = vector.load %arg8[%c0_15, %c0_16] : memref<32x32xf32, #tpu.memory_space<vmem>>, vector<32x32xf32>
    %c0_17 = arith.constant 0 : index
    %c0_18 = arith.constant 0 : index
    %36 = vector.load %arg9[%c0_17, %c0_18] : memref<32x1xf32, #tpu.memory_space<vmem>>, vector<32x1xf32>
    %cst_19 = arith.constant dense<0.000000e+00> : vector<32x128xf32>
    %37 = tpu.matmul %35, %34, %cst_19 {dimension_numbers = #tpu.dot_dimension_numbers<[1], [0], [0], [1], [0, 0, 1, 1], [], []>} : vector<32x32xf32>, vector<32x128xf32>, vector<32x128xf32> -> vector<32x128xf32>
    %38 = vector.broadcast %36 : vector<32x1xf32> to vector<32x128xf32>
    %39 = arith.addf %37, %38 : vector<32x128xf32>
    %40 = math.tanh %39 : vector<32x128xf32>
    %c0_20 = arith.constant 0 : index
    %c0_21 = arith.constant 0 : index
    %41 = vector.load %arg10[%c0_20, %c0_21] : memref<32x32xf32, #tpu.memory_space<vmem>>, vector<32x32xf32>
    %c0_22 = arith.constant 0 : index
    %c0_23 = arith.constant 0 : index
    %42 = vector.load %arg11[%c0_22, %c0_23] : memref<32x1xf32, #tpu.memory_space<vmem>>, vector<32x1xf32>
    %cst_24 = arith.constant dense<0.000000e+00> : vector<32x128xf32>
    %43 = tpu.matmul %41, %40, %cst_24 {dimension_numbers = #tpu.dot_dimension_numbers<[1], [0], [0], [1], [0, 0, 1, 1], [], []>} : vector<32x32xf32>, vector<32x128xf32>, vector<32x128xf32> -> vector<32x128xf32>
    %44 = vector.broadcast %42 : vector<32x1xf32> to vector<32x128xf32>
    %45 = arith.addf %43, %44 : vector<32x128xf32>
    %46 = math.tanh %45 : vector<32x128xf32>
    %c0_25 = arith.constant 0 : index
    %c0_26 = arith.constant 0 : index
    %47 = vector.load %arg12[%c0_25, %c0_26] : memref<1x32xf32, #tpu.memory_space<vmem>>, vector<1x32xf32>
    %cst_27 = arith.constant dense<0.000000e+00> : vector<1x128xf32>
    %48 = tpu.matmul %47, %46, %cst_27 {dimension_numbers = #tpu.dot_dimension_numbers<[1], [0], [0], [1], [0, 0, 1, 1], [], []>} : vector<1x32xf32>, vector<32x128xf32>, vector<1x128xf32> -> vector<1x128xf32>
    %c0_28 = arith.constant 0 : index
    %c0_29 = arith.constant 0 : index
    %49 = vector.load %arg13[%c0_28, %c0_29] : memref<1x1xf32, #tpu.memory_space<vmem>>, vector<1x1xf32>
    %50 = vector.broadcast %49 : vector<1x1xf32> to vector<1x128xf32>
    %51 = arith.addf %48, %50 : vector<1x128xf32>
    %c0_30 = arith.constant 0 : index
    %c0_31 = arith.constant 0 : index
    %52 = vector.load %arg14[%c0_30, %c0_31] : memref<1x128xf32, #tpu.memory_space<vmem>>, vector<1x128xf32>
    tpu.vector_store %arg14[%c0_30, %c0_31], %51 {strides = array<i32>} : memref<1x128xf32, #tpu.memory_space<vmem>>, vector<1x128xf32>,
    return
  }
  func.func @transform_0(%arg0: i32) -> (i32, i32) {
    %c0_i32 = arith.constant 0 : i32
    %c0_i32_0 = arith.constant 0 : i32
    return %c0_i32, %arg0 : i32, i32
  }
  func.func @transform_1(%arg0: i32) -> (i32, i32) {
    %c0_i32 = arith.constant 0 : i32
    %c0_i32_0 = arith.constant 0 : i32
    %c0_i32_1 = arith.constant 0 : i32
    return %c0_i32, %c0_i32_0 : i32, i32
  }
  func.func @transform_2(%arg0: i32) -> (i32, i32) {
    %c0_i32 = arith.constant 0 : i32
    %c0_i32_0 = arith.constant 0 : i32
    %c0_i32_1 = arith.constant 0 : i32
    return %c0_i32, %c0_i32_0 : i32, i32
  }
  func.func @transform_3(%arg0: i32) -> (i32, i32) {
    %c0_i32 = arith.constant 0 : i32
    %c0_i32_0 = arith.constant 0 : i32
    %c0_i32_1 = arith.constant 0 : i32
    return %c0_i32, %c0_i32_0 : i32, i32
  }
  func.func @transform_4(%arg0: i32) -> (i32, i32) {
    %c0_i32 = arith.constant 0 : i32
    %c0_i32_0 = arith.constant 0 : i32
    %c0_i32_1 = arith.constant 0 : i32
    return %c0_i32, %c0_i32_0 : i32, i32
  }
  func.func @transform_5(%arg0: i32) -> (i32, i32) {
    %c0_i32 = arith.constant 0 : i32
    %c0_i32_0 = arith.constant 0 : i32
    %c0_i32_1 = arith.constant 0 : i32
    return %c0_i32, %c0_i32_0 : i32, i32
  }
  func.func @transform_6(%arg0: i32) -> (i32, i32) {
    %c0_i32 = arith.constant 0 : i32
    %c0_i32_0 = arith.constant 0 : i32
    %c0_i32_1 = arith.constant 0 : i32
    return %c0_i32, %c0_i32_0 : i32, i32
  }
  func.func @transform_7(%arg0: i32) -> (i32, i32) {
    %c0_i32 = arith.constant 0 : i32
    %c0_i32_0 = arith.constant 0 : i32
    %c0_i32_1 = arith.constant 0 : i32
    return %c0_i32, %c0_i32_0 : i32, i32
  }
  func.func @transform_8(%arg0: i32) -> (i32, i32) {
    %c0_i32 = arith.constant 0 : i32
    %c0_i32_0 = arith.constant 0 : i32
    %c0_i32_1 = arith.constant 0 : i32
    return %c0_i32, %c0_i32_0 : i32, i32
  }
  func.func @transform_9(%arg0: i32) -> (i32, i32) {
    %c0_i32 = arith.constant 0 : i32
    %c0_i32_0 = arith.constant 0 : i32
    %c0_i32_1 = arith.constant 0 : i32
    return %c0_i32, %c0_i32_0 : i32, i32
  }
  func.func @transform_10(%arg0: i32) -> (i32, i32) {
    %c0_i32 = arith.constant 0 : i32
    %c0_i32_0 = arith.constant 0 : i32
    %c0_i32_1 = arith.constant 0 : i32
    return %c0_i32, %c0_i32_0 : i32, i32
  }
  func.func @transform_11(%arg0: i32) -> (i32, i32) {
    %c0_i32 = arith.constant 0 : i32
    %c0_i32_0 = arith.constant 0 : i32
    %c0_i32_1 = arith.constant 0 : i32
    return %c0_i32, %c0_i32_0 : i32, i32
  }
  func.func @transform_12(%arg0: i32) -> (i32, i32) {
    %c0_i32 = arith.constant 0 : i32
    %c0_i32_0 = arith.constant 0 : i32
    %c0_i32_1 = arith.constant 0 : i32
    return %c0_i32, %c0_i32_0 : i32, i32
  }
  func.func @transform_13(%arg0: i32) -> (i32, i32) {
    %c0_i32 = arith.constant 0 : i32
    %c0_i32_0 = arith.constant 0 : i32
    return %c0_i32, %arg0 : i32, i32
  }
}

</mosaic_0001>

<llo_original>
// kernel: tpu_custom_call.1
$region0: #{tpu_custom_call.1}
  #allocation0 [shape = 'u32[]', space=smem, size = 0x4, offset = 0x4, fixed_abs, tag = 'smem constant byte address 0x4 - core index']
  #allocation1 [shape = 'u32[144,128]{1,0:T(1,128)}', space=vmem, size = 0x12000, scoped, tag = 'internal scratch']
  #allocation2 [shape = 'f32[1,1]{1,0:T(1,128)S(1)}', space=vmem, size = 0x200, scoped, tag = 'scoped memory for tpu_custom_call.1']
  %s0 = inlined_call_operand.vmem [shape: f32[2,256], index: 0, kind: input, shape index: {}]
  %s1 = inlined_call_operand.vmem [shape: f32[32,3], index: 1, kind: input, shape index: {}]
  %s2 = inlined_call_operand.vmem [shape: f32[32,1], index: 2, kind: input, shape index: {}]
  %s3 = inlined_call_operand.vmem [shape: f32[32,32], index: 3, kind: input, shape index: {}]
  %s4 = inlined_call_operand.vmem [shape: f32[32,1], index: 4, kind: input, shape index: {}]
  %s5 = inlined_call_operand.vmem [shape: f32[32,32], index: 5, kind: input, shape index: {}]
  %s6 = inlined_call_operand.vmem [shape: f32[32,1], index: 6, kind: input, shape index: {}]
  %s7 = inlined_call_operand.vmem [shape: f32[32,32], index: 7, kind: input, shape index: {}]
  %s8 = inlined_call_operand.vmem [shape: f32[32,1], index: 8, kind: input, shape index: {}]
  %s9 = inlined_call_operand.vmem [shape: f32[32,32], index: 9, kind: input, shape index: {}]
  %s10 = inlined_call_operand.vmem [shape: f32[32,1], index: 10, kind: input, shape index: {}]
  %s11 = inlined_call_operand.vmem [shape: f32[1,32], index: 11, kind: input, shape index: {}]
  %s12 = inlined_call_operand.<no memory space> [shape: f32[1,1], index: 12, kind: input, shape index: {}]
  %s13 = inlined_call_operand.hbm [shape: f32[1,256], index: 13, kind: output, shape index: {}]
  %s14 = sld [smem:[#allocation0]]
  $region85: #{tpu_custom_call.1} parent=0
    _
  %s16 = ssub.s32 1, %s14
  %s17 = scalar_select 0, %s16, %s14
  %v18 = vstv %s12
  %19 = vst [vmem:[#allocation2] sm:$0x1] %v18
  $region1: #{tpu_custom_call.1} parent=0
    #allocation3 [shape = 'u8[1024]{0}', space=vmem, size = 0x400, scoped, tag = 'output window, operand 0']
    #allocation4 [shape = 's32[2]{0}', space=sflag, size = 0x8, scoped, tag = 'scoped memory for tpu_custom_call.1']
    %20 = vsyncpa [#allocation4], 0
    %s21 = scalar_lea.sflag [#allocation4], 1
    %22 = vsyncpa %s21, 0
    loop: start=0, step=1, limit=4
    $region2: #{tpu_custom_call.1} parent=1 // loop_pre_header
      _
    $region3: #{tpu_custom_call.1} parent=1 // loop_header
      %s24 = sphi 0, %s28
      %p25 = scmp.ge.s32.totalorder %s24, 4
      %s34 = sphi 0, %s36
      %s37 = sphi 0, %s34
      %s38 = sphi 0, %s37
      %s54 = sphi 0, %s38
      %s58 = sphi 0, %s58
      %s60 = sphi 0, %s58
      %s61 = sphi 0, %s60
      %s75 = sphi 0, %s61
      %s79 = sphi 0, %s79
      %s81 = sphi 0, %s79
      %s82 = sphi 0, %s81
      %s96 = sphi 0, %s82
      %s100 = sphi 0, %s100
      %s102 = sphi 0, %s100
      %s103 = sphi 0, %s102
      %s117 = sphi 0, %s103
      %s121 = sphi 0, %s121
      %s123 = sphi 0, %s121
      %s124 = sphi 0, %s123
      %s138 = sphi 0, %s124
      %s142 = sphi 0, %s142
      %s144 = sphi 0, %s142
      %s145 = sphi 0, %s144
      %s159 = sphi 0, %s145
      %s163 = sphi 0, %s163
      %s165 = sphi 0, %s163
      %s166 = sphi 0, %s165
      %s180 = sphi 0, %s166
      %s184 = sphi 0, %s184
      %s186 = sphi 0, %s184
      %s187 = sphi 0, %s186
      %s201 = sphi 0, %s187
      %s205 = sphi 0, %s205
      %s207 = sphi 0, %s205
      %s208 = sphi 0, %s207
      %s222 = sphi 0, %s208
      %s226 = sphi 0, %s226
      %s228 = sphi 0, %s226
      %s229 = sphi 0, %s228
      %s243 = sphi 0, %s229
      %s247 = sphi 0, %s247
      %s249 = sphi 0, %s247
      %s250 = sphi 0, %s249
      %s264 = sphi 0, %s250
      %s268 = sphi 0, %s268
      %s270 = sphi 0, %s268
      %s271 = sphi 0, %s270
      %s285 = sphi 0, %s271
      %s289 = sphi 0, %s289
      %s291 = sphi 0, %s289
      %s292 = sphi 0, %s291
      %s306 = sphi 0, %s292
      %s312 = sphi 0, %s314
      %s315 = sphi 0, %s312
      %s316 = sphi 0, %s315
      %s332 = sphi 0, %s316
    $region4: #{tpu_custom_call.1} parent=1 // loop_header_branch
      %27 = sbr.rel (%p25) target = $region8
    $region5: #{tpu_custom_call.1} parent=1 // loop_body
      %s29 = ssub.s32 %s24, 1
      %s30 = ssub.s32 %s24, 2
      %s31 = sadd.s32 %s24, 1
      %s32 = ssub.s32 %s24, %s31
      %p33 = scmp.eq.s32.totalorder %s32, 0
      %s35 = sadd.s32 %s34, 1
      %s36 = scalar_select %p33, %s34, %s35
      %p39 = pneg %p33
      %p40 = scmp.eq.s32.totalorder %s24, 1
      %p41 = por %p39, %p40
      %p42 = scmp.ne.s32.totalorder %s34, %s37
      %p43 = scmp.eq.s32.totalorder %s24, 0
      %p44 = por %p42, %p43
      %p45 = scmp.ne.s32.totalorder %s34, %s37
      %p46 = scmp.eq.s32.totalorder %s29, 1
      %p47 = por %p45, %p46
      %p48 = scmp.ne.s32.totalorder %s37, %s38
      %p49 = scmp.eq.s32.totalorder %s29, 0
      %p50 = por %p48, %p49
      %p51 = scmp.ne.s32.totalorder %s37, %s38
      %p52 = scmp.eq.s32.totalorder %s30, 1
      %p53 = por %p51, %p52
      %p55 = scmp.ne.s32.totalorder %s38, %s54
      %p56 = scmp.eq.s32.totalorder %s30, 0
      %p57 = por %p55, %p56
      %s59 = sadd.s32 %s58, 1
      %p62 = scmp.eq.s32.totalorder %s24, 1
      %p63 = scmp.ne.s32.totalorder %s58, %s60
      %p64 = scmp.eq.s32.totalorder %s24, 0
      %p65 = por %p63, %p64
      %p66 = scmp.ne.s32.totalorder %s58, %s60
      %p67 = scmp.eq.s32.totalorder %s29, 1
      %p68 = por %p66, %p67
      %p69 = scmp.ne.s32.totalorder %s60, %s61
      %p70 = scmp.eq.s32.totalorder %s29, 0
      %p71 = por %p69, %p70
      %p72 = scmp.ne.s32.totalorder %s60, %s61
      %p73 = scmp.eq.s32.totalorder %s30, 1
      %p74 = por %p72, %p73
      %p76 = scmp.ne.s32.totalorder %s61, %s75
      %p77 = scmp.eq.s32.totalorder %s30, 0
      %p78 = por %p76, %p77
      %s80 = sadd.s32 %s79, 1
      %p83 = scmp.eq.s32.totalorder %s24, 1
      %p84 = scmp.ne.s32.totalorder %s79, %s81
      %p85 = scmp.eq.s32.totalorder %s24, 0
      %p86 = por %p84, %p85
      %p87 = scmp.ne.s32.totalorder %s79, %s81
      %p88 = scmp.eq.s32.totalorder %s29, 1
      %p89 = por %p87, %p88
      %p90 = scmp.ne.s32.totalorder %s81, %s82
      %p91 = scmp.eq.s32.totalorder %s29, 0
      %p92 = por %p90, %p91
      %p93 = scmp.ne.s32.totalorder %s81, %s82
      %p94 = scmp.eq.s32.totalorder %s30, 1
      %p95 = por %p93, %p94
      %p97 = scmp.ne.s32.totalorder %s82, %s96
      %p98 = scmp.eq.s32.totalorder %s30, 0
      %p99 = por %p97, %p98
      %s101 = sadd.s32 %s100, 1
      %p104 = scmp.eq.s32.totalorder %s24, 1
      %p105 = scmp.ne.s32.totalorder %s100, %s102
      %p106 = scmp.eq.s32.totalorder %s24, 0
      %p107 = por %p105, %p106
      %p108 = scmp.ne.s32.totalorder %s100, %s102
      %p109 = scmp.eq.s32.totalorder %s29, 1
      %p110 = por %p108, %p109
      %p111 = scmp.ne.s32.totalorder %s102, %s103
      %p112 = scmp.eq.s32.totalorder %s29, 0
      %p113 = por %p111, %p112
      %p114 = scmp.ne.s32.totalorder %s102, %s103
      %p115 = scmp.eq.s32.totalorder %s30, 1
      %p116 = por %p114, %p115
      %p118 = scmp.ne.s32.totalorder %s103, %s117
      %p119 = scmp.eq.s32.totalorder %s30, 0
      %p120 = por %p118, %p119
      %s122 = sadd.s32 %s121, 1
      %p125 = scmp.eq.s32.totalorder %s24, 1
      %p126 = scmp.ne.s32.totalorder %s121, %s123
      %p127 = scmp.eq.s32.totalorder %s24, 0
      %p128 = por %p126, %p127
      %p129 = scmp.ne.s32.totalorder %s121, %s123
      %p130 = scmp.eq.s32.totalorder %s29, 1
      %p131 = por %p129, %p130
      %p132 = scmp.ne.s32.totalorder %s123, %s124
      %p133 = scmp.eq.s32.totalorder %s29, 0
      %p134 = por %p132, %p133
      %p135 = scmp.ne.s32.totalorder %s123, %s124
      %p136 = scmp.eq.s32.totalorder %s30, 1
      %p137 = por %p135, %p136
      %p139 = scmp.ne.s32.totalorder %s124, %s138
      %p140 = scmp.eq.s32.totalorder %s30, 0
      %p141 = por %p139, %p140
      %s143 = sadd.s32 %s142, 1
      %p146 = scmp.eq.s32.totalorder %s24, 1
      %p147 = scmp.ne.s32.totalorder %s142, %s144
      %p148 = scmp.eq.s32.totalorder %s24, 0
      %p149 = por %p147, %p148
      %p150 = scmp.ne.s32.totalorder %s142, %s144
      %p151 = scmp.eq.s32.totalorder %s29, 1
      %p152 = por %p150, %p151
      %p153 = scmp.ne.s32.totalorder %s144, %s145
      %p154 = scmp.eq.s32.totalorder %s29, 0
      %p155 = por %p153, %p154
      %p156 = scmp.ne.s32.totalorder %s144, %s145
      %p157 = scmp.eq.s32.totalorder %s30, 1
      %p158 = por %p156, %p157
      %p160 = scmp.ne.s32.totalorder %s145, %s159
      %p161 = scmp.eq.s32.totalorder %s30, 0
      %p162 = por %p160, %p161
      %s164 = sadd.s32 %s163, 1
      %p167 = scmp.eq.s32.totalorder %s24, 1
      %p168 = scmp.ne.s32.totalorder %s163, %s165
      %p169 = scmp.eq.s32.totalorder %s24, 0
      %p170 = por %p168, %p169
      %p171 = scmp.ne.s32.totalorder %s163, %s165
      %p172 = scmp.eq.s32.totalorder %s29, 1
      %p173 = por %p171, %p172
      %p174 = scmp.ne.s32.totalorder %s165, %s166
      %p175 = scmp.eq.s32.totalorder %s29, 0
      %p176 = por %p174, %p175
      %p177 = scmp.ne.s32.totalorder %s165, %s166
      %p178 = scmp.eq.s32.totalorder %s30, 1
      %p179 = por %p177, %p178
      %p181 = scmp.ne.s32.totalorder %s166, %s180
      %p182 = scmp.eq.s32.totalorder %s30, 0
      %p183 = por %p181, %p182
      %s185 = sadd.s32 %s184, 1
      %p188 = scmp.eq.s32.totalorder %s24, 1
      %p189 = scmp.ne.s32.totalorder %s184, %s186
      %p190 = scmp.eq.s32.totalorder %s24, 0
      %p191 = por %p189, %p190
      %p192 = scmp.ne.s32.totalorder %s184, %s186
      %p193 = scmp.eq.s32.totalorder %s29, 1
      %p194 = por %p192, %p193
      %p195 = scmp.ne.s32.totalorder %s186, %s187
      %p196 = scmp.eq.s32.totalorder %s29, 0
      %p197 = por %p195, %p196
      %p198 = scmp.ne.s32.totalorder %s186, %s187
      %p199 = scmp.eq.s32.totalorder %s30, 1
      %p200 = por %p198, %p199
      %p202 = scmp.ne.s32.totalorder %s187, %s201
      %p203 = scmp.eq.s32.totalorder %s30, 0
      %p204 = por %p202, %p203
      %s206 = sadd.s32 %s205, 1
      %p209 = scmp.eq.s32.totalorder %s24, 1
      %p210 = scmp.ne.s32.totalorder %s205, %s207
      %p211 = scmp.eq.s32.totalorder %s24, 0
      %p212 = por %p210, %p211
      %p213 = scmp.ne.s32.totalorder %s205, %s207
      %p214 = scmp.eq.s32.totalorder %s29, 1
      %p215 = por %p213, %p214
      %p216 = scmp.ne.s32.totalorder %s207, %s208
      %p217 = scmp.eq.s32.totalorder %s29, 0
      %p218 = por %p216, %p217
      %p219 = scmp.ne.s32.totalorder %s207, %s208
      %p220 = scmp.eq.s32.totalorder %s30, 1
      %p221 = por %p219, %p220
      %p223 = scmp.ne.s32.totalorder %s208, %s222
      %p224 = scmp.eq.s32.totalorder %s30, 0
      %p225 = por %p223, %p224
      %s227 = sadd.s32 %s226, 1
      %p230 = scmp.eq.s32.totalorder %s24, 1
      %p231 = scmp.ne.s32.totalorder %s226, %s228
      %p232 = scmp.eq.s32.totalorder %s24, 0
      %p233 = por %p231, %p232
      %p234 = scmp.ne.s32.totalorder %s226, %s228
      %p235 = scmp.eq.s32.totalorder %s29, 1
      %p236 = por %p234, %p235
      %p237 = scmp.ne.s32.totalorder %s228, %s229
      %p238 = scmp.eq.s32.totalorder %s29, 0
      %p239 = por %p237, %p238
      %p240 = scmp.ne.s32.totalorder %s228, %s229
      %p241 = scmp.eq.s32.totalorder %s30, 1
      %p242 = por %p240, %p241
      %p244 = scmp.ne.s32.totalorder %s229, %s243
      %p245 = scmp.eq.s32.totalorder %s30, 0
      %p246 = por %p244, %p245
      %s248 = sadd.s32 %s247, 1
      %p251 = scmp.eq.s32.totalorder %s24, 1
      %p252 = scmp.ne.s32.totalorder %s247, %s249
      %p253 = scmp.eq.s32.totalorder %s24, 0
      %p254 = por %p252, %p253
      %p255 = scmp.ne.s32.totalorder %s247, %s249
      %p256 = scmp.eq.s32.totalorder %s29, 1
      %p257 = por %p255, %p256
      %p258 = scmp.ne.s32.totalorder %s249, %s250
      %p259 = scmp.eq.s32.totalorder %s29, 0
      %p260 = por %p258, %p259
      %p261 = scmp.ne.s32.totalorder %s249, %s250
      %p262 = scmp.eq.s32.totalorder %s30, 1
      %p263 = por %p261, %p262
      %p265 = scmp.ne.s32.totalorder %s250, %s264
      %p266 = scmp.eq.s32.totalorder %s30, 0
      %p267 = por %p265, %p266
      %s269 = sadd.s32 %s268, 1
      %p272 = scmp.eq.s32.totalorder %s24, 1
      %p273 = scmp.ne.s32.totalorder %s268, %s270
      %p274 = scmp.eq.s32.totalorder %s24, 0
      %p275 = por %p273, %p274
      %p276 = scmp.ne.s32.totalorder %s268, %s270
      %p277 = scmp.eq.s32.totalorder %s29, 1
      %p278 = por %p276, %p277
      %p279 = scmp.ne.s32.totalorder %s270, %s271
      %p280 = scmp.eq.s32.totalorder %s29, 0
      %p281 = por %p279, %p280
      %p282 = scmp.ne.s32.totalorder %s270, %s271
      %p283 = scmp.eq.s32.totalorder %s30, 1
      %p284 = por %p282, %p283
      %p286 = scmp.ne.s32.totalorder %s271, %s285
      %p287 = scmp.eq.s32.totalorder %s30, 0
      %p288 = por %p286, %p287
      %s290 = sadd.s32 %s289, 1
      %p293 = scmp.eq.s32.totalorder %s24, 1
      %p294 = scmp.ne.s32.totalorder %s289, %s291
      %p295 = scmp.eq.s32.totalorder %s24, 0
      %p296 = por %p294, %p295
      %p297 = scmp.ne.s32.totalorder %s289, %s291
      %p298 = scmp.eq.s32.totalorder %s29, 1
      %p299 = por %p297, %p298
      %p300 = scmp.ne.s32.totalorder %s291, %s292
      %p301 = scmp.eq.s32.totalorder %s29, 0
      %p302 = por %p300, %p301
      %p303 = scmp.ne.s32.totalorder %s291, %s292
      %p304 = scmp.eq.s32.totalorder %s30, 1
      %p305 = por %p303, %p304
      %p307 = scmp.ne.s32.totalorder %s292, %s306
      %p308 = scmp.eq.s32.totalorder %s30, 0
      %p309 = por %p307, %p308
      %s310 = ssub.s32 %s24, %s31
      %p311 = scmp.eq.s32.totalorder %s310, 0
      %s313 = sadd.s32 %s312, 1
      %s314 = scalar_select %p311, %s312, %s313
      %p317 = pneg %p311
      %p318 = scmp.eq.s32.totalorder %s24, 1
      %p319 = por %p317, %p318
      %p320 = scmp.ne.s32.totalorder %s312, %s315
      %p321 = scmp.eq.s32.totalorder %s24, 0
      %p322 = por %p320, %p321
      %p323 = scmp.ne.s32.totalorder %s312, %s315
      %p324 = scmp.eq.s32.totalorder %s29, 1
      %p325 = por %p323, %p324
      %p326 = scmp.ne.s32.totalorder %s315, %s316
      %p327 = scmp.eq.s32.totalorder %s29, 0
      %p328 = por %p326, %p327
      %p329 = scmp.ne.s32.totalorder %s315, %s316
      %p330 = scmp.eq.s32.totalorder %s30, 1
      %p331 = por %p329, %p330
      %p333 = scmp.ne.s32.totalorder %s316, %s332
      %p334 = scmp.eq.s32.totalorder %s30, 0
      %p335 = por %p333, %p334
      %p336 = scmp.le.s32.totalorder 1, %s24
      %p337 = scmp.lt.s32.totalorder %s24, 3
      %p338 = pnand %p336, %p337
      %p339 = pneg %p338
      // Predicated region
      $region9: #{tpu_custom_call.1} parent=5 // pred_check
        _
      $region10: #{tpu_custom_call.1} parent=5 // pred_check_branch
        %341 = sbr.rel (%p338) target = $region12
      $region11: #{tpu_custom_call.1} parent=5 // pred_region
        %s342 = ssub.s32 %s24, 1
        // Predicated region
        $region13: #{tpu_custom_call.1} parent=11 // pred_check
          %p343 = pneg %p71
        $region14: #{tpu_custom_call.1} parent=11 // pred_check_branch
          %345 = sbr.rel (%p343) target = $region16
        $region15: #{tpu_custom_call.1} parent=11 // pred_region
          _
        $region16: #{tpu_custom_call.1} parent=11 // pred_fallthru
          _
        // Predicated region
        $region17: #{tpu_custom_call.1} parent=11 // pred_check
          %p346 = pneg %p92
        $region18: #{tpu_custom_call.1} parent=11 // pred_check_branch
          %348 = sbr.rel (%p346) target = $region20
        $region19: #{tpu_custom_call.1} parent=11 // pred_region
          _
        $region20: #{tpu_custom_call.1} parent=11 // pred_fallthru
          _
        // Predicated region
        $region21: #{tpu_custom_call.1} parent=11 // pred_check
          %p349 = pneg %p113
        $region22: #{tpu_custom_call.1} parent=11 // pred_check_branch
          %351 = sbr.rel (%p349) target = $region24
        $region23: #{tpu_custom_call.1} parent=11 // pred_region
          _
        $region24: #{tpu_custom_call.1} parent=11 // pred_fallthru
          _
        // Predicated region
        $region25: #{tpu_custom_call.1} parent=11 // pred_check
          %p352 = pneg %p134
        $region26: #{tpu_custom_call.1} parent=11 // pred_check_branch
          %354 = sbr.rel (%p352) target = $region28
        $region27: #{tpu_custom_call.1} parent=11 // pred_region
          _
        $region28: #{tpu_custom_call.1} parent=11 // pred_fallthru
          _
        // Predicated region
        $region29: #{tpu_custom_call.1} parent=11 // pred_check
          %p355 = pneg %p155
        $region30: #{tpu_custom_call.1} parent=11 // pred_check_branch
          %357 = sbr.rel (%p355) target = $region32
        $region31: #{tpu_custom_call.1} parent=11 // pred_region
          _
        $region32: #{tpu_custom_call.1} parent=11 // pred_fallthru
          _
        // Predicated region
        $region33: #{tpu_custom_call.1} parent=11 // pred_check
          %p358 = pneg %p176
        $region34: #{tpu_custom_call.1} parent=11 // pred_check_branch
          %360 = sbr.rel (%p358) target = $region36
        $region35: #{tpu_custom_call.1} parent=11 // pred_region
          _
        $region36: #{tpu_custom_call.1} parent=11 // pred_fallthru
          _
        // Predicated region
        $region37: #{tpu_custom_call.1} parent=11 // pred_check
          %p361 = pneg %p197
        $region38: #{tpu_custom_call.1} parent=11 // pred_check_branch
          %363 = sbr.rel (%p361) target = $region40
        $region39: #{tpu_custom_call.1} parent=11 // pred_region
          _
        $region40: #{tpu_custom_call.1} parent=11 // pred_fallthru
          _
        // Predicated region
        $region41: #{tpu_custom_call.1} parent=11 // pred_check
          %p364 = pneg %p218
        $region42: #{tpu_custom_call.1} parent=11 // pred_check_branch
          %366 = sbr.rel (%p364) target = $region44
        $region43: #{tpu_custom_call.1} parent=11 // pred_region
          _
        $region44: #{tpu_custom_call.1} parent=11 // pred_fallthru
          _
        // Predicated region
        $region45: #{tpu_custom_call.1} parent=11 // pred_check
          %p367 = pneg %p239
        $region46: #{tpu_custom_call.1} parent=11 // pred_check_branch
          %369 = sbr.rel (%p367) target = $region48
        $region47: #{tpu_custom_call.1} parent=11 // pred_region
          _
        $region48: #{tpu_custom_call.1} parent=11 // pred_fallthru
          _
        // Predicated region
        $region49: #{tpu_custom_call.1} parent=11 // pred_check
          %p370 = pneg %p260
        $region50: #{tpu_custom_call.1} parent=11 // pred_check_branch
          %372 = sbr.rel (%p370) target = $region52
        $region51: #{tpu_custom_call.1} parent=11 // pred_region
          _
        $region52: #{tpu_custom_call.1} parent=11 // pred_fallthru
          _
        // Predicated region
        $region53: #{tpu_custom_call.1} parent=11 // pred_check
          %p373 = pneg %p281
        $region54: #{tpu_custom_call.1} parent=11 // pred_check_branch
          %375 = sbr.rel (%p373) target = $region56
        $region55: #{tpu_custom_call.1} parent=11 // pred_region
          _
        $region56: #{tpu_custom_call.1} parent=11 // pred_fallthru
          _
        // Predicated region
        $region57: #{tpu_custom_call.1} parent=11 // pred_check
          %p376 = pneg %p302
        $region58: #{tpu_custom_call.1} parent=11 // pred_check_branch
          %378 = sbr.rel (%p376) target = $region60
        $region59: #{tpu_custom_call.1} parent=11 // pred_region
          _
        $region60: #{tpu_custom_call.1} parent=11 // pred_fallthru
          _
      $region12: #{tpu_custom_call.1} parent=5 // pred_fallthru
        _
      %p379 = scmp.lt.s32.totalorder %s24, 2
      // Predicated region
      $region61: #{tpu_custom_call.1} parent=5 // pred_check
        %p380 = pneg %p379
      $region62: #{tpu_custom_call.1} parent=5 // pred_check_branch
        %382 = sbr.rel (%p380) target = $region64
      $region63: #{tpu_custom_call.1} parent=5 // pred_region
        // Predicated region
        $region65: #{tpu_custom_call.1} parent=63 // pred_check
          %p383 = pneg %p44
        $region66: #{tpu_custom_call.1} parent=63 // pred_check_branch
          %385 = sbr.rel (%p383) target = $region68
        $region67: #{tpu_custom_call.1} parent=63 // pred_region
          %p386 = scmp.lt.s32.totalorder %s24, 1
          %s387 = scalar_select %p386, %s24, 1
          %s388 = smul.addr %s387, 2
          %s389 = scalar_lea.vmem %s0, %s388
        $region68: #{tpu_custom_call.1} parent=63 // pred_fallthru
          _
      $region64: #{tpu_custom_call.1} parent=5 // pred_fallthru
        _
      %p390 = scmp.le.s32.totalorder 1, %s24
      %p391 = scmp.lt.s32.totalorder %s24, 3
      %p392 = pnand %p390, %p391
      %p393 = pneg %p392
      // Predicated region
      $region69: #{tpu_custom_call.1} parent=5 // pred_check
        _
      $region70: #{tpu_custom_call.1} parent=5 // pred_check_branch
        %395 = sbr.rel (%p392) target = $region72
      $region71: #{tpu_custom_call.1} parent=5 // pred_region
        %s396 = ssub.s32 %s24, 1
        %p397 = scmp.lt.s32.totalorder %s29, 1
        %s398 = scalar_select %p397, %s29, 1
        %s399 = smul.addr %s398, 2
        %s400 = scalar_lea.vmem %s0, %s399
        %p401 = pneg %p50
        %p402 = pneg %p47
        %p403 = pneg %p71
        %p404 = pneg %p68
        %p405 = pneg %p92
        %p406 = pneg %p89
        %p407 = pneg %p113
        %p408 = pneg %p110
        %p409 = pneg %p134
        %p410 = pneg %p131
        %p411 = pneg %p155
        %p412 = pneg %p152
        %p413 = pneg %p176
        %p414 = pneg %p173
        %p415 = pneg %p197
        %p416 = pneg %p194
        %p417 = pneg %p218
        %p418 = pneg %p215
        %p419 = pneg %p239
        %p420 = pneg %p236
        %p421 = pneg %p260
        %p422 = pneg %p257
        %p423 = pneg %p281
        %p424 = pneg %p278
        %p425 = pneg %p302
        %p426 = pneg %p299
        %p427 = pneg %p328
        %p428 = pneg %p325
        %s429 = sand.u32 %s315, 1
        %s430 = scalar_lea.sflag [#allocation4], %s429
        %s431 = sand.u32 %s315, 1
        %s432 = scalar_lea.vmem [#allocation3], %s431
        %p433 = scmp.lt.s32.totalorder %s29, 1
        %s434 = scalar_select %p433, %s29, 1
        %s435 = smul.addr %s434, 2
        %s436 = scalar_lea.vmem %s0, %s435
        %v437 = vld [vmem:[%s436] sm:$0x1]
        %v438 = vld [vmem:[%s436 + $0x1] sm:$0x1]
        %v439 = vld [vmem:[%s1] sm:$0xff]
        %v440 = vld [vmem:[%s1 + $0x8] sm:$0xff]
        %v441 = vld [vmem:[%s1 + $0x10] sm:$0xff]
        %v442 = vld [vmem:[%s1 + $0x18] sm:$0xff]
        %v443 = vand.u32 2147483647, %v437
        %vm444 = vcmp.le.f32.partialorder %v443, 0.7853982
        %vm445 = vcmp.lt.s32.totalorder %v437, 0
        %v446 = vand.u32 %v437, 2139095040
        %v447 = vshrl.u32 %v446, 23
        %v448 = vsub.s32 %v447, 127
        %v449 = vand.u32 2147483647, %v437
        %v450 = vand.u32 %v449, 8388607
        %v451 = vor.u32 %v450, 8388608
        %v452 = vsub.s32 0, %v451
        %v453 = vadd.s32 %v448, 1
        %vm454 = vcmp.gt.s32.totalorder %v453, 0
        %v455 = vsel %vm454, %v453, 0
        %v456 = vshrl.u32 %v455, 5
        %v457 = vand.u32 %v455, 31
        %v458 = vsub.s32 32, %v457
        %v459 = vshrl.u32 683565275, %v458
        %v460 = vshll.u32 683565275, %v457
        %v461 = vshrl.u32 2475754826, %v458
        %v462 = vor.u32 %v460, %v461
        %v463 = vshll.u32 2475754826, %v457
        %v464 = vshrl.u32 2131351028, %v458
        %v465 = vor.u32 %v463, %v464
        %v466 = vshll.u32 2131351028, %v457
        %v467 = vshrl.u32 2102212464, %v458
        %v468 = vor.u32 %v466, %v467
        %v469 = vshll.u32 2102212464, %v457
        %v470 = vshrl.u32 920167782, %v458
        %v471 = vor.u32 %v469, %v470
        %v472 = vshll.u32 920167782, %v457
        %v473 = vshrl.u32 1326507024, %v458
        %v474 = vor.u32 %v472, %v473
        %vm475 = vcmp.lt.s32.totalorder %v456, 1
        %vm476 = vcmp.lt.s32.totalorder %v456, 2
        %vm477 = vcmp.lt.s32.totalorder %v456, 3
        %vm478 = vcmp.lt.s32.totalorder %v456, 4
        %v479 = vsel %vm475, %v459, %v462
        %v480 = vsel %vm478, %v468, 2102212464
        %v481 = vsel %vm477, %v465, %v480
        %v482 = vsel %vm476, %v479, %v481
        %v483 = vsel %vm475, %v462, %v465
        %v484 = vsel %vm478, %v471, 920167782
        %v485 = vsel %vm477, %v468, %v484
        %v486 = vsel %vm476, %v483, %v485
        %v487 = vsel %vm475, %v465, %v468
        %v488 = vsel %vm478, %v474, 1326507024
        %v489 = vsel %vm477, %v471, %v488
        %v490 = vsel %vm476, %v487, %v489
        %v491 = vshll.u32 %v451, 8
        %v492 = vmul.u32.u64.compose %v491, %v490
        %v493 = vextract.low.u32 %v492
        %v494 = vextract.high.u32 %v492
        %v495 = vmul.u32.u64.compose %v491, %v486
        %v496 = vextract.low.u32 %v495
        %v497 = vextract.high.u32 %v495
        %v498 = vmul.u32 %v491, %v482
        %v499 = vadd.s32 %v494, %v496
        %vm500 = vc.u32 %v494, %v496
        %v501 = vadd.s32 %v497, 1
        %v502 = vsel %vm500, %v501, %v497
        %v503 = vadd.s32 %v498, %v502
        %v504 = vadd.s32 %v503, 536870912
        %v505 = vshrl.u32 %v504, 30
        %v506 = vshll.u32 %v505, 30
        %v507 = vsub.s32 %v503, %v506
        %vm508 = vcmp.lt.s32.totalorder %v507, 0
        %v509 = vsub.s32 0, %v507
        %v510 = vsel %vm508, %v509, %v507
        %v511 = vclz %v510
        %v512 = vsub.s32 %v511, 2
        %vm513 = vcmp.gt.s32.totalorder 0, %v512
        %v514 = vsel %vm513, 0, %v512
        %v515 = vsub.s32 32, %v514
        %v516 = vshll.u32 %v507, %v514
        %v517 = vshrl.u32 %v499, %v515
        %v518 = vor.u32 %v516, %v517
        %v519 = vsub.s32 4294967266, %v514
        %v520 = vadd.s32 %v519, 127
        %v521 = vshll.u32 %v520, 23
        %v522 = vor.u32 4788187, %v521
        %v523 = vand.u32 2147483647, %v522
        %v525 = vcvt.s32.f32 %v518
        %v526 = vmul.f32 %v525, %v523
        %v527 = vxor.u32 %v526, 2147483648
        %v528 = vsel %vm445, %v527, %v526
        %v529 = vsub.s32 4, %v505
        %v530 = vsel %vm445, %v529, %v505
        %v531 = vsel %vm444, %v437, %v528
        %v532 = vsel %vm444, 0, %v530
        %v533 = vcosq.f32.pop %v531
        %v534 = vsinq.f32.pop %v531
        %vm535 = vweird.f32 %v437
        %v536 = vand.u32 %v532, 3
        %vm537 = vcmp.lt.s32.totalorder %v536, 2
        %vm538 = vcmp.eq.s32.totalorder %v536, 0
        %v539 = vxor.u32 %v534, 2147483648
        %v540 = vsel %vm538, %v533, %v539
        %vm541 = vcmp.eq.s32.totalorder %v536, 2
        %v542 = vxor.u32 %v533, 2147483648
        %v543 = vsel %vm541, %v542, %v534
        %v544 = vsel %vm537, %v540, %v543
        %v545 = vsel %vm535, nan, %v544
        %547 = vset.pattern.permute.xlu0 0
        %548 = vperm.xlu0 %547, %v439
        %v549 = vpop.permute.xlu0 %548
        %552 = vset.pattern.permute.xlu0 0
        %553 = vperm.xlu0 %552, %v440
        %v554 = vpop.permute.xlu0 %553
        %557 = vset.pattern.permute.xlu0 0
        %558 = vperm.xlu0 %557, %v441
        %v559 = vpop.permute.xlu0 %558
        %562 = vset.pattern.permute.xlu0 0
        %563 = vperm.xlu0 %562, %v442
        %v564 = vpop.permute.xlu0 %563
        %v566 = vlaneseq
        %v567 = vshrl.u32 %v566, 7
        %v568 = vsub.s32 0, %v567
        %v569 = vrot.slane %v545, %v568
        %v570 = vmul.f32 %v549, %v569
        %v571 = vmul.f32 %v554, %v569
        %v572 = vmul.f32 %v559, %v569
        %v573 = vmul.f32 %v564, %v569
        %v574 = vand.u32 2147483647, %v437
        %vm575 = vcmp.le.f32.partialorder %v574, 0.7853982
        %vm576 = vcmp.lt.s32.totalorder %v437, 0
        %v577 = vand.u32 %v437, 2139095040
        %v578 = vshrl.u32 %v577, 23
        %v579 = vsub.s32 %v578, 127
        %v580 = vand.u32 2147483647, %v437
        %v581 = vand.u32 %v580, 8388607
        %v582 = vor.u32 %v581, 8388608
        %v583 = vsub.s32 0, %v582
        %v584 = vadd.s32 %v579, 1
        %vm585 = vcmp.gt.s32.totalorder %v584, 0
        %v586 = vsel %vm585, %v584, 0
        %v587 = vshrl.u32 %v586, 5
        %v588 = vand.u32 %v586, 31
        %v589 = vsub.s32 32, %v588
        %v590 = vshrl.u32 683565275, %v589
        %v591 = vshll.u32 683565275, %v588
        %v592 = vshrl.u32 2475754826, %v589
        %v593 = vor.u32 %v591, %v592
        %v594 = vshll.u32 2475754826, %v588
        %v595 = vshrl.u32 2131351028, %v589
        %v596 = vor.u32 %v594, %v595
        %v597 = vshll.u32 2131351028, %v588
        %v598 = vshrl.u32 2102212464, %v589
        %v599 = vor.u32 %v597, %v598
        %v600 = vshll.u32 2102212464, %v588
        %v601 = vshrl.u32 920167782, %v589
        %v602 = vor.u32 %v600, %v601
        %v603 = vshll.u32 920167782, %v588
        %v604 = vshrl.u32 1326507024, %v589
        %v605 = vor.u32 %v603, %v604
        %vm606 = vcmp.lt.s32.totalorder %v587, 1
        %vm607 = vcmp.lt.s32.totalorder %v587, 2
        %vm608 = vcmp.lt.s32.totalorder %v587, 3
        %vm609 = vcmp.lt.s32.totalorder %v587, 4
        %v610 = vsel %vm606, %v590, %v593
        %v611 = vsel %vm609, %v599, 2102212464
        %v612 = vsel %vm608, %v596, %v611
        %v613 = vsel %vm607, %v610, %v612
        %v614 = vsel %vm606, %v593, %v596
        %v615 = vsel %vm609, %v602, 920167782
        %v616 = vsel %vm608, %v599, %v615
        %v617 = vsel %vm607, %v614, %v616
        %v618 = vsel %vm606, %v596, %v599
        %v619 = vsel %vm609, %v605, 1326507024
        %v620 = vsel %vm608, %v602, %v619
        %v621 = vsel %vm607, %v618, %v620
        %v622 = vshll.u32 %v582, 8
        %v623 = vmul.u32.u64.compose %v622, %v621
        %v624 = vextract.low.u32 %v623
        %v625 = vextract.high.u32 %v623
        %v626 = vmul.u32.u64.compose %v622, %v617
        %v627 = vextract.low.u32 %v626
        %v628 = vextract.high.u32 %v626
        %v629 = vmul.u32 %v622, %v613
        %v630 = vadd.s32 %v625, %v627
        %vm631 = vc.u32 %v625, %v627
        %v632 = vadd.s32 %v628, 1
        %v633 = vsel %vm631, %v632, %v628
        %v634 = vadd.s32 %v629, %v633
        %v635 = vadd.s32 %v634, 536870912
        %v636 = vshrl.u32 %v635, 30
        %v637 = vshll.u32 %v636, 30
        %v638 = vsub.s32 %v634, %v637
        %vm639 = vcmp.lt.s32.totalorder %v638, 0
        %v640 = vsub.s32 0, %v638
        %v641 = vsel %vm639, %v640, %v638
        %v642 = vclz %v641
        %v643 = vsub.s32 %v642, 2
        %vm644 = vcmp.gt.s32.totalorder 0, %v643
        %v645 = vsel %vm644, 0, %v643
        %v646 = vsub.s32 32, %v645
        %v647 = vshll.u32 %v638, %v645
        %v648 = vshrl.u32 %v630, %v646
        %v649 = vor.u32 %v647, %v648
        %v650 = vsub.s32 4294967266, %v645
        %v651 = vadd.s32 %v650, 127
        %v652 = vshll.u32 %v651, 23
        %v653 = vor.u32 4788187, %v652
        %v654 = vand.u32 2147483647, %v653
        %v656 = vcvt.s32.f32 %v649
        %v657 = vmul.f32 %v656, %v654
        %v658 = vxor.u32 %v657, 2147483648
        %v659 = vsel %vm576, %v658, %v657
        %v660 = vsub.s32 4, %v636
        %v661 = vsel %vm576, %v660, %v636
        %v662 = vsel %vm575, %v437, %v659
        %v663 = vsel %vm575, 0, %v661
        %v664 = vcosq.f32.pop %v662
        %v665 = vsinq.f32.pop %v662
        %vm666 = vweird.f32 %v437
        %v667 = vadd.s32 %v663, 3
        %v668 = vand.u32 %v667, 3
        %vm669 = vcmp.lt.s32.totalorder %v668, 2
        %vm670 = vcmp.eq.s32.totalorder %v668, 0
        %v671 = vxor.u32 %v665, 2147483648
        %v672 = vsel %vm670, %v664, %v671
        %vm673 = vcmp.eq.s32.totalorder %v668, 2
        %v674 = vxor.u32 %v664, 2147483648
        %v675 = vsel %vm673, %v674, %v665
        %v676 = vsel %vm669, %v672, %v675
        %v677 = vsel %vm666, nan, %v676
        %678 = vset.pattern.permute.xlu0 1
        %679 = vperm.xlu0 %678, %v439
        %v680 = vpop.permute.xlu0 %679
        %682 = vset.pattern.permute.xlu0 1
        %683 = vperm.xlu0 %682, %v440
        %v684 = vpop.permute.xlu0 %683
        %686 = vset.pattern.permute.xlu0 1
        %687 = vperm.xlu0 %686, %v441
        %v688 = vpop.permute.xlu0 %687
        %690 = vset.pattern.permute.xlu0 1
        %691 = vperm.xlu0 %690, %v442
        %v692 = vpop.permute.xlu0 %691
        %v694 = vlaneseq
        %v695 = vshrl.u32 %v694, 7
        %v696 = vsub.s32 0, %v695
        %v697 = vrot.slane %v677, %v696
        %v698 = vmul.f32 %v680, %v697
        %v699 = vmul.f32 %v684, %v697
        %v700 = vmul.f32 %v688, %v697
        %v701 = vmul.f32 %v692, %v697
        %v702 = vadd.f32 %v570, %v698
        %v703 = vadd.f32 %v571, %v699
        %v704 = vadd.f32 %v572, %v700
        %v705 = vadd.f32 %v573, %v701
        %706 = vset.pattern.permute.xlu0 2
        %707 = vperm.xlu0 %706, %v439
        %v708 = vpop.permute.xlu0 %707
        %710 = vset.pattern.permute.xlu0 2
        %711 = vperm.xlu0 %710, %v440
        %v712 = vpop.permute.xlu0 %711
        %714 = vset.pattern.permute.xlu0 2
        %715 = vperm.xlu0 %714, %v441
        %v716 = vpop.permute.xlu0 %715
        %718 = vset.pattern.permute.xlu0 2
        %719 = vperm.xlu0 %718, %v442
        %v720 = vpop.permute.xlu0 %719
        %v722 = vlaneseq
        %v723 = vshrl.u32 %v722, 7
        %v724 = vsub.s32 0, %v723
        %v725 = vrot.slane %v438, %v724
        %v726 = vmul.f32 %v708, %v725
        %v727 = vmul.f32 %v712, %v725
        %v728 = vmul.f32 %v716, %v725
        %v729 = vmul.f32 %v720, %v725
        %v730 = vadd.f32 %v702, %v726
        %v731 = vadd.f32 %v703, %v727
        %v732 = vadd.f32 %v704, %v728
        %v733 = vadd.f32 %v705, %v729
        %v734 = vld [vmem:[%s2] sm:$0xff]
        %v735 = vld [vmem:[%s2 + $0x8] sm:$0xff]
        %v736 = vld [vmem:[%s2 + $0x10] sm:$0xff]
        %v737 = vld [vmem:[%s2 + $0x18] sm:$0xff]
        %739 = vset.pattern.permute.xlu0 0
        %740 = vperm.xlu0 %739, %v734
        %v741 = vpop.permute.xlu0 %740
        %744 = vset.pattern.permute.xlu0 0
        %745 = vperm.xlu0 %744, %v735
        %v746 = vpop.permute.xlu0 %745
        %749 = vset.pattern.permute.xlu0 0
        %750 = vperm.xlu0 %749, %v736
        %v751 = vpop.permute.xlu0 %750
        %754 = vset.pattern.permute.xlu0 0
        %755 = vperm.xlu0 %754, %v737
        %v756 = vpop.permute.xlu0 %755
        %v758 = vadd.f32 %v730, %v741
        %v759 = vadd.f32 %v731, %v746
        %v760 = vadd.f32 %v732, %v751
        %v761 = vadd.f32 %v733, %v756
        %v762 = vtanh.pop %v758
        %v763 = vtanh.pop %v759
        %v764 = vtanh.pop %v760
        %v765 = vtanh.pop %v761
        %v766 = vld [vmem:[%s3] sm:$0xff]
        %v767 = vld [vmem:[%s3 + $0x8] sm:$0xff]
        %v768 = vld [vmem:[%s3 + $0x10] sm:$0xff]
        %v769 = vld [vmem:[%s3 + $0x18] sm:$0xff]
        %v770 = vld [vmem:[%s4] sm:$0xff]
        %v771 = vld [vmem:[%s4 + $0x8] sm:$0xff]
        %v772 = vld [vmem:[%s4 + $0x10] sm:$0xff]
        %v773 = vld [vmem:[%s4 + $0x18] sm:$0xff]
        %775 = vset.pattern.permute.xlu0 0
        %776 = vperm.xlu0 %775, %v770
        %v777 = vpop.permute.xlu0 %776
        %780 = vset.pattern.permute.xlu0 0
        %781 = vperm.xlu0 %780, %v771
        %v782 = vpop.permute.xlu0 %781
        %785 = vset.pattern.permute.xlu0 0
        %786 = vperm.xlu0 %785, %v772
        %v787 = vpop.permute.xlu0 %786
        %790 = vset.pattern.permute.xlu0 0
        %791 = vperm.xlu0 %790, %v773
        %v792 = vpop.permute.xlu0 %791
        %vm794 = vcmask 261120
        %v796 = vsel %vm794, %v766, 0
        %v799 = vsel %vm794, %v767, 0
        %v802 = vsel %vm794, %v768, 0
        %v805 = vsel %vm794, %v769, 0
        %807 = vmatprep.subr.mxu0 0.0
        %808 = vmatpush1.msra.mxu0 %v762
        %809 = vmatprep.subr.mxu0 0.0
        %810 = vmatpush1.msra.mxu0 %v763
        %811 = vmatprep.subr.mxu0 0.0
        %812 = vmatpush1.msra.mxu0 %v764
        %813 = vmatprep.subr.mxu0 0.0
        %814 = vmatpush1.msra.mxu0 %v765
        %815 = vmatprep.subr.mxu0 0.0
        %816 = vmatpush1.msra.mxu0 0.0
        %817 = vmatprep.subr.mxu0 0.0
        %818 = vmatpush1.msra.mxu0 0.0
        %819 = vmatprep.subr.mxu0 0.0
        %820 = vmatpush1.msra.mxu0 0.0
        %821 = vmatprep.subr.mxu0 0.0
        %822 = vmatpush1.msra.mxu0 0.0
        %823 = vmatprep.subr.mxu0 0.0
        %824 = vmatpush1.msra.mxu0 0.0
        %825 = vmatprep.subr.mxu0 0.0
        %826 = vmatpush1.msra.mxu0 0.0
        %827 = vmatprep.subr.mxu0 0.0
        %828 = vmatpush1.msra.mxu0 0.0
        %829 = vmatprep.subr.mxu0 0.0
        %830 = vmatpush1.msra.mxu0 0.0
        %831 = vmatprep.subr.mxu0 0.0
        %832 = vmatpush1.msra.mxu0 0.0
        %833 = vmatprep.subr.mxu0 0.0
        %834 = vmatpush1.msra.mxu0 0.0
        %835 = vmatprep.subr.mxu0 0.0
        %836 = vmatpush1.msra.mxu0 0.0
        %837 = vmatprep.subr.mxu0 0.0
        %838 = vmatpush1.msra.mxu0 0.0
        %839 = vmatprep.subr.mxu0 0.0
        %840 = vmatpush1.msra.mxu0 0.0
        %841 = vmatprep.subr.mxu0 0.0
        %842 = vmatpush1.msra.mxu0 0.0
        %843 = vmatprep.subr.mxu0 0.0
        %844 = vmatpush1.msra.mxu0 0.0
        %845 = vmatprep.subr.mxu0 0.0
        %846 = vmatpush1.msra.mxu0 0.0
        %847 = vmatprep.subr.mxu0 0.0
        %848 = vmatpush1.msra.mxu0 0.0
        %849 = vmatprep.subr.mxu0 0.0
        %850 = vmatpush1.msra.mxu0 0.0
        %851 = vmatprep.subr.mxu0 0.0
        %852 = vmatpush1.msra.mxu0 0.0
        %853 = vmatprep.subr.mxu0 0.0
        %854 = vmatpush1.msra.mxu0 0.0
        %855 = vmatprep.subr.mxu0 0.0
        %856 = vmatpush1.msra.mxu0 0.0
        %857 = vmatprep.subr.mxu0 0.0
        %858 = vmatpush1.msra.mxu0 0.0
        %859 = vmatprep.subr.mxu0 0.0
        %860 = vmatpush1.msra.mxu0 0.0
        %861 = vmatprep.subr.mxu0 0.0
        %862 = vmatpush1.msra.mxu0 0.0
        %863 = vmatprep.subr.mxu0 0.0
        %864 = vmatpush1.msra.mxu0 0.0
        %865 = vmatprep.subr.mxu0 0.0
        %866 = vmatpush1.msra.mxu0 0.0
        %867 = vmatprep.subr.mxu0 0.0
        %868 = vmatpush1.msra.mxu0 0.0
        %869 = vmatprep.subr.mxu0 0.0
        %870 = vmatpush1.msra.mxu0 0.0
        %871 = vmatprep.mubr.f32.mxu0 0.0
        %872 = vmatmul.mubr.f32.gmra.mrb[0].mxu0 %v796
        %v873 = vpop.f32.mrb[0].mxu0
        %v874 = vadd.f32 %v777, %v873
        %v875 = vpop.f32.mrb[0].mxu0
        %876 = vmatprep.mubr.f32.mxu0 0.0
        %877 = vmatmul.mubr.f32.gmra.mrb[0].mxu0 %v799
        %v878 = vpop.f32.mrb[0].mxu0
        %v879 = vadd.f32 %v782, %v878
        %v880 = vpop.f32.mrb[0].mxu0
        %881 = vmatprep.mubr.f32.mxu0 0.0
        %882 = vmatmul.mubr.f32.gmra.mrb[0].mxu0 %v802
        %v883 = vpop.f32.mrb[0].mxu0
        %v884 = vadd.f32 %v787, %v883
        %v885 = vpop.f32.mrb[0].mxu0
        %886 = vmatprep.mubr.f32.mxu0 0.0
        %887 = vmatmul.mubr.f32.gmra.mrb[0].mxu0 %v805
        %v888 = vpop.f32.mrb[0].mxu0
        %v889 = vadd.f32 %v792, %v888
        %v890 = vpop.f32.mrb[0].mxu0
        %891 = vdwg.mxu0
        %v892 = vtanh.pop %v874
        %v893 = vtanh.pop %v879
        %v894 = vtanh.pop %v884
        %v895 = vtanh.pop %v889
        %v896 = vld [vmem:[%s5] sm:$0xff]
        %v897 = vld [vmem:[%s5 + $0x8] sm:$0xff]
        %v898 = vld [vmem:[%s5 + $0x10] sm:$0xff]
        %v899 = vld [vmem:[%s5 + $0x18] sm:$0xff]
        %v900 = vld [vmem:[%s6] sm:$0xff]
        %v901 = vld [vmem:[%s6 + $0x8] sm:$0xff]
        %v902 = vld [vmem:[%s6 + $0x10] sm:$0xff]
        %v903 = vld [vmem:[%s6 + $0x18] sm:$0xff]
        %905 = vset.pattern.permute.xlu0 0
        %906 = vperm.xlu0 %905, %v900
        %v907 = vpop.permute.xlu0 %906
        %910 = vset.pattern.permute.xlu0 0
        %911 = vperm.xlu0 %910, %v901
        %v912 = vpop.permute.xlu0 %911
        %915 = vset.pattern.permute.xlu0 0
        %916 = vperm.xlu0 %915, %v902
        %v917 = vpop.permute.xlu0 %916
        %920 = vset.pattern.permute.xlu0 0
        %921 = vperm.xlu0 %920, %v903
        %v922 = vpop.permute.xlu0 %921
        %v925 = vsel %vm794, %v896, 0
        %v928 = vsel %vm794, %v897, 0
        %v931 = vsel %vm794, %v898, 0
        %v934 = vsel %vm794, %v899, 0
        %936 = vmatprep.subr.mxu0 0.0
        %937 = vmatpush1.msra.mxu0 %v892
        %938 = vmatprep.subr.mxu0 0.0
        %939 = vmatpush1.msra.mxu0 %v893
        %940 = vmatprep.subr.mxu0 0.0
        %941 = vmatpush1.msra.mxu0 %v894
        %942 = vmatprep.subr.mxu0 0.0
        %943 = vmatpush1.msra.mxu0 %v895
        %944 = vmatprep.subr.mxu0 0.0
        %945 = vmatpush1.msra.mxu0 0.0
        %946 = vmatprep.subr.mxu0 0.0
        %947 = vmatpush1.msra.mxu0 0.0
        %948 = vmatprep.subr.mxu0 0.0
        %949 = vmatpush1.msra.mxu0 0.0
        %950 = vmatprep.subr.mxu0 0.0
        %951 = vmatpush1.msra.mxu0 0.0
        %952 = vmatprep.subr.mxu0 0.0
        %953 = vmatpush1.msra.mxu0 0.0
        %954 = vmatprep.subr.mxu0 0.0
        %955 = vmatpush1.msra.mxu0 0.0
        %956 = vmatprep.subr.mxu0 0.0
        %957 = vmatpush1.msra.mxu0 0.0
        %958 = vmatprep.subr.mxu0 0.0
        %959 = vmatpush1.msra.mxu0 0.0
        %960 = vmatprep.subr.mxu0 0.0
        %961 = vmatpush1.msra.mxu0 0.0
        %962 = vmatprep.subr.mxu0 0.0
        %963 = vmatpush1.msra.mxu0 0.0
        %964 = vmatprep.subr.mxu0 0.0
        %965 = vmatpush1.msra.mxu0 0.0
        %966 = vmatprep.subr.mxu0 0.0
        %967 = vmatpush1.msra.mxu0 0.0
        %968 = vmatprep.subr.mxu0 0.0
        %969 = vmatpush1.msra.mxu0 0.0
        %970 = vmatprep.subr.mxu0 0.0
        %971 = vmatpush1.msra.mxu0 0.0
        %972 = vmatprep.subr.mxu0 0.0
        %973 = vmatpush1.msra.mxu0 0.0
        %974 = vmatprep.subr.mxu0 0.0
        %975 = vmatpush1.msra.mxu0 0.0
        %976 = vmatprep.subr.mxu0 0.0
        %977 = vmatpush1.msra.mxu0 0.0
        %978 = vmatprep.subr.mxu0 0.0
        %979 = vmatpush1.msra.mxu0 0.0
        %980 = vmatprep.subr.mxu0 0.0
        %981 = vmatpush1.msra.mxu0 0.0
        %982 = vmatprep.subr.mxu0 0.0
        %983 = vmatpush1.msra.mxu0 0.0
        %984 = vmatprep.subr.mxu0 0.0
        %985 = vmatpush1.msra.mxu0 0.0
        %986 = vmatprep.subr.mxu0 0.0
        %987 = vmatpush1.msra.mxu0 0.0
        %988 = vmatprep.subr.mxu0 0.0
        %989 = vmatpush1.msra.mxu0 0.0
        %990 = vmatprep.subr.mxu0 0.0
        %991 = vmatpush1.msra.mxu0 0.0
        %992 = vmatprep.subr.mxu0 0.0
        %993 = vmatpush1.msra.mxu0 0.0
        %994 = vmatprep.subr.mxu0 0.0
        %995 = vmatpush1.msra.mxu0 0.0
        %996 = vmatprep.subr.mxu0 0.0
        %997 = vmatpush1.msra.mxu0 0.0
        %998 = vmatprep.subr.mxu0 0.0
        %999 = vmatpush1.msra.mxu0 0.0
        %1000 = vmatprep.mubr.f32.mxu0 0.0
        %1001 = vmatmul.mubr.f32.gmra.mrb[0].mxu0 %v925
        %v1002 = vpop.f32.mrb[0].mxu0
        %v1003 = vadd.f32 %v907, %v1002
        %v1004 = vpop.f32.mrb[0].mxu0
        %1005 = vmatprep.mubr.f32.mxu0 0.0
        %1006 = vmatmul.mubr.f32.gmra.mrb[0].mxu0 %v928
        %v1007 = vpop.f32.mrb[0].mxu0
        %v1008 = vadd.f32 %v912, %v1007
        %v1009 = vpop.f32.mrb[0].mxu0
        %1010 = vmatprep.mubr.f32.mxu0 0.0
        %1011 = vmatmul.mubr.f32.gmra.mrb[0].mxu0 %v931
        %v1012 = vpop.f32.mrb[0].mxu0
        %v1013 = vadd.f32 %v917, %v1012
        %v1014 = vpop.f32.mrb[0].mxu0
        %1015 = vmatprep.mubr.f32.mxu0 0.0
        %1016 = vmatmul.mubr.f32.gmra.mrb[0].mxu0 %v934
        %v1017 = vpop.f32.mrb[0].mxu0
        %v1018 = vadd.f32 %v922, %v1017
        %v1019 = vpop.f32.mrb[0].mxu0
        %1020 = vdwg.mxu0
        %v1021 = vtanh.pop %v1003
        %v1022 = vtanh.pop %v1008
        %v1023 = vtanh.pop %v1013
        %v1024 = vtanh.pop %v1018
        %v1025 = vld [vmem:[%s7] sm:$0xff]
        %v1026 = vld [vmem:[%s7 + $0x8] sm:$0xff]
        %v1027 = vld [vmem:[%s7 + $0x10] sm:$0xff]
        %v1028 = vld [vmem:[%s7 + $0x18] sm:$0xff]
        %v1029 = vld [vmem:[%s8] sm:$0xff]
        %v1030 = vld [vmem:[%s8 + $0x8] sm:$0xff]
        %v1031 = vld [vmem:[%s8 + $0x10] sm:$0xff]
        %v1032 = vld [vmem:[%s8 + $0x18] sm:$0xff]
        %1034 = vset.pattern.permute.xlu0 0
        %1035 = vperm.xlu0 %1034, %v1029
        %v1036 = vpop.permute.xlu0 %1035
        %1039 = vset.pattern.permute.xlu0 0
        %1040 = vperm.xlu0 %1039, %v1030
        %v1041 = vpop.permute.xlu0 %1040
        %1044 = vset.pattern.permute.xlu0 0
        %1045 = vperm.xlu0 %1044, %v1031
        %v1046 = vpop.permute.xlu0 %1045
        %1049 = vset.pattern.permute.xlu0 0
        %1050 = vperm.xlu0 %1049, %v1032
        %v1051 = vpop.permute.xlu0 %1050
        %v1054 = vsel %vm794, %v1025, 0
        %v1057 = vsel %vm794, %v1026, 0
        %v1060 = vsel %vm794, %v1027, 0
        %v1063 = vsel %vm794, %v1028, 0
        %1065 = vmatprep.subr.mxu0 0.0
        %1066 = vmatpush1.msra.mxu0 %v1021
        %1067 = vmatprep.subr.mxu0 0.0
        %1068 = vmatpush1.msra.mxu0 %v1022
        %1069 = vmatprep.subr.mxu0 0.0
        %1070 = vmatpush1.msra.mxu0 %v1023
        %1071 = vmatprep.subr.mxu0 0.0
        %1072 = vmatpush1.msra.mxu0 %v1024
        %1073 = vmatprep.subr.mxu0 0.0
        %1074 = vmatpush1.msra.mxu0 0.0
        %1075 = vmatprep.subr.mxu0 0.0
        %1076 = vmatpush1.msra.mxu0 0.0
        %1077 = vmatprep.subr.mxu0 0.0
        %1078 = vmatpush1.msra.mxu0 0.0
        %1079 = vmatprep.subr.mxu0 0.0
        %1080 = vmatpush1.msra.mxu0 0.0
        %1081 = vmatprep.subr.mxu0 0.0
        %1082 = vmatpush1.msra.mxu0 0.0
        %1083 = vmatprep.subr.mxu0 0.0
        %1084 = vmatpush1.msra.mxu0 0.0
        %1085 = vmatprep.subr.mxu0 0.0
        %1086 = vmatpush1.msra.mxu0 0.0
        %1087 = vmatprep.subr.mxu0 0.0
        %1088 = vmatpush1.msra.mxu0 0.0
        %1089 = vmatprep.subr.mxu0 0.0
        %1090 = vmatpush1.msra.mxu0 0.0
        %1091 = vmatprep.subr.mxu0 0.0
        %1092 = vmatpush1.msra.mxu0 0.0
        %1093 = vmatprep.subr.mxu0 0.0
        %1094 = vmatpush1.msra.mxu0 0.0
        %1095 = vmatprep.subr.mxu0 0.0
        %1096 = vmatpush1.msra.mxu0 0.0
        %1097 = vmatprep.subr.mxu0 0.0
        %1098 = vmatpush1.msra.mxu0 0.0
        %1099 = vmatprep.subr.mxu0 0.0
        %1100 = vmatpush1.msra.mxu0 0.0
        %1101 = vmatprep.subr.mxu0 0.0
        %1102 = vmatpush1.msra.mxu0 0.0
        %1103 = vmatprep.subr.mxu0 0.0
        %1104 = vmatpush1.msra.mxu0 0.0
        %1105 = vmatprep.subr.mxu0 0.0
        %1106 = vmatpush1.msra.mxu0 0.0
        %1107 = vmatprep.subr.mxu0 0.0
        %1108 = vmatpush1.msra.mxu0 0.0
        %1109 = vmatprep.subr.mxu0 0.0
        %1110 = vmatpush1.msra.mxu0 0.0
        %1111 = vmatprep.subr.mxu0 0.0
        %1112 = vmatpush1.msra.mxu0 0.0
        %1113 = vmatprep.subr.mxu0 0.0
        %1114 = vmatpush1.msra.mxu0 0.0
        %1115 = vmatprep.subr.mxu0 0.0
        %1116 = vmatpush1.msra.mxu0 0.0
        %1117 = vmatprep.subr.mxu0 0.0
        %1118 = vmatpush1.msra.mxu0 0.0
        %1119 = vmatprep.subr.mxu0 0.0
        %1120 = vmatpush1.msra.mxu0 0.0
        %1121 = vmatprep.subr.mxu0 0.0
        %1122 = vmatpush1.msra.mxu0 0.0
        %1123 = vmatprep.subr.mxu0 0.0
        %1124 = vmatpush1.msra.mxu0 0.0
        %1125 = vmatprep.subr.mxu0 0.0
        %1126 = vmatpush1.msra.mxu0 0.0
        %1127 = vmatprep.subr.mxu0 0.0
        %1128 = vmatpush1.msra.mxu0 0.0
        %1129 = vmatprep.mubr.f32.mxu0 0.0
        %1130 = vmatmul.mubr.f32.gmra.mrb[0].mxu0 %v1054
        %v1131 = vpop.f32.mrb[0].mxu0
        %v1132 = vadd.f32 %v1036, %v1131
        %v1133 = vpop.f32.mrb[0].mxu0
        %1134 = vmatprep.mubr.f32.mxu0 0.0
        %1135 = vmatmul.mubr.f32.gmra.mrb[0].mxu0 %v1057
        %v1136 = vpop.f32.mrb[0].mxu0
        %v1137 = vadd.f32 %v1041, %v1136
        %v1138 = vpop.f32.mrb[0].mxu0
        %1139 = vmatprep.mubr.f32.mxu0 0.0
        %1140 = vmatmul.mubr.f32.gmra.mrb[0].mxu0 %v1060
        %v1141 = vpop.f32.mrb[0].mxu0
        %v1142 = vadd.f32 %v1046, %v1141
        %v1143 = vpop.f32.mrb[0].mxu0
        %1144 = vmatprep.mubr.f32.mxu0 0.0
        %1145 = vmatmul.mubr.f32.gmra.mrb[0].mxu0 %v1063
        %v1146 = vpop.f32.mrb[0].mxu0
        %v1147 = vadd.f32 %v1051, %v1146
        %v1148 = vpop.f32.mrb[0].mxu0
        %1149 = vdwg.mxu0
        %v1150 = vtanh.pop %v1132
        %v1151 = vtanh.pop %v1137
        %v1152 = vtanh.pop %v1142
        %v1153 = vtanh.pop %v1147
        %v1154 = vld [vmem:[%s9] sm:$0xff]
        %v1155 = vld [vmem:[%s9 + $0x8] sm:$0xff]
        %v1156 = vld [vmem:[%s9 + $0x10] sm:$0xff]
        %v1157 = vld [vmem:[%s9 + $0x18] sm:$0xff]
        %v1158 = vld [vmem:[%s10] sm:$0xff]
        %v1159 = vld [vmem:[%s10 + $0x8] sm:$0xff]
        %v1160 = vld [vmem:[%s10 + $0x10] sm:$0xff]
        %v1161 = vld [vmem:[%s10 + $0x18] sm:$0xff]
        %1163 = vset.pattern.permute.xlu0 0
        %1164 = vperm.xlu0 %1163, %v1158
        %v1165 = vpop.permute.xlu0 %1164
        %1168 = vset.pattern.permute.xlu0 0
        %1169 = vperm.xlu0 %1168, %v1159
        %v1170 = vpop.permute.xlu0 %1169
        %1173 = vset.pattern.permute.xlu0 0
        %1174 = vperm.xlu0 %1173, %v1160
        %v1175 = vpop.permute.xlu0 %1174
        %1178 = vset.pattern.permute.xlu0 0
        %1179 = vperm.xlu0 %1178, %v1161
        %v1180 = vpop.permute.xlu0 %1179
        %v1183 = vsel %vm794, %v1154, 0
        %v1186 = vsel %vm794, %v1155, 0
        %v1189 = vsel %vm794, %v1156, 0
        %v1192 = vsel %vm794, %v1157, 0
        %1194 = vmatprep.subr.mxu0 0.0
        %1195 = vmatpush1.msra.mxu0 %v1150
        %1196 = vmatprep.subr.mxu0 0.0
        %1197 = vmatpush1.msra.mxu0 %v1151
        %1198 = vmatprep.subr.mxu0 0.0
        %1199 = vmatpush1.msra.mxu0 %v1152
        %1200 = vmatprep.subr.mxu0 0.0
        %1201 = vmatpush1.msra.mxu0 %v1153
        %1202 = vmatprep.subr.mxu0 0.0
        %1203 = vmatpush1.msra.mxu0 0.0
        %1204 = vmatprep.subr.mxu0 0.0
        %1205 = vmatpush1.msra.mxu0 0.0
        %1206 = vmatprep.subr.mxu0 0.0
        %1207 = vmatpush1.msra.mxu0 0.0
        %1208 = vmatprep.subr.mxu0 0.0
        %1209 = vmatpush1.msra.mxu0 0.0
        %1210 = vmatprep.subr.mxu0 0.0
        %1211 = vmatpush1.msra.mxu0 0.0
        %1212 = vmatprep.subr.mxu0 0.0
        %1213 = vmatpush1.msra.mxu0 0.0
        %1214 = vmatprep.subr.mxu0 0.0
        %1215 = vmatpush1.msra.mxu0 0.0
        %1216 = vmatprep.subr.mxu0 0.0
        %1217 = vmatpush1.msra.mxu0 0.0
        %1218 = vmatprep.subr.mxu0 0.0
        %1219 = vmatpush1.msra.mxu0 0.0
        %1220 = vmatprep.subr.mxu0 0.0
        %1221 = vmatpush1.msra.mxu0 0.0
        %1222 = vmatprep.subr.mxu0 0.0
        %1223 = vmatpush1.msra.mxu0 0.0
        %1224 = vmatprep.subr.mxu0 0.0
        %1225 = vmatpush1.msra.mxu0 0.0
        %1226 = vmatprep.subr.mxu0 0.0
        %1227 = vmatpush1.msra.mxu0 0.0
        %1228 = vmatprep.subr.mxu0 0.0
        %1229 = vmatpush1.msra.mxu0 0.0
        %1230 = vmatprep.subr.mxu0 0.0
        %1231 = vmatpush1.msra.mxu0 0.0
        %1232 = vmatprep.subr.mxu0 0.0
        %1233 = vmatpush1.msra.mxu0 0.0
        %1234 = vmatprep.subr.mxu0 0.0
        %1235 = vmatpush1.msra.mxu0 0.0
        %1236 = vmatprep.subr.mxu0 0.0
        %1237 = vmatpush1.msra.mxu0 0.0
        %1238 = vmatprep.subr.mxu0 0.0
        %1239 = vmatpush1.msra.mxu0 0.0
        %1240 = vmatprep.subr.mxu0 0.0
        %1241 = vmatpush1.msra.mxu0 0.0
        %1242 = vmatprep.subr.mxu0 0.0
        %1243 = vmatpush1.msra.mxu0 0.0
        %1244 = vmatprep.subr.mxu0 0.0
        %1245 = vmatpush1.msra.mxu0 0.0
        %1246 = vmatprep.subr.mxu0 0.0
        %1247 = vmatpush1.msra.mxu0 0.0
        %1248 = vmatprep.subr.mxu0 0.0
        %1249 = vmatpush1.msra.mxu0 0.0
        %1250 = vmatprep.subr.mxu0 0.0
        %1251 = vmatpush1.msra.mxu0 0.0
        %1252 = vmatprep.subr.mxu0 0.0
        %1253 = vmatpush1.msra.mxu0 0.0
        %1254 = vmatprep.subr.mxu0 0.0
        %1255 = vmatpush1.msra.mxu0 0.0
        %1256 = vmatprep.subr.mxu0 0.0
        %1257 = vmatpush1.msra.mxu0 0.0
        %1258 = vmatprep.mubr.f32.mxu0 0.0
        %1259 = vmatmul.mubr.f32.gmra.mrb[0].mxu0 %v1183
        %v1260 = vpop.f32.mrb[0].mxu0
        %v1261 = vadd.f32 %v1165, %v1260
        %v1262 = vpop.f32.mrb[0].mxu0
        %1263 = vmatprep.mubr.f32.mxu0 0.0
        %1264 = vmatmul.mubr.f32.gmra.mrb[0].mxu0 %v1186
        %v1265 = vpop.f32.mrb[0].mxu0
        %v1266 = vadd.f32 %v1170, %v1265
        %v1267 = vpop.f32.mrb[0].mxu0
        %1268 = vmatprep.mubr.f32.mxu0 0.0
        %1269 = vmatmul.mubr.f32.gmra.mrb[0].mxu0 %v1189
        %v1270 = vpop.f32.mrb[0].mxu0
        %v1271 = vadd.f32 %v1175, %v1270
        %v1272 = vpop.f32.mrb[0].mxu0
        %1273 = vmatprep.mubr.f32.mxu0 0.0
        %1274 = vmatmul.mubr.f32.gmra.mrb[0].mxu0 %v1192
        %v1275 = vpop.f32.mrb[0].mxu0
        %v1276 = vadd.f32 %v1180, %v1275
        %v1277 = vpop.f32.mrb[0].mxu0
        %1278 = vdwg.mxu0
        %v1279 = vtanh.pop %v1261
        %v1280 = vtanh.pop %v1266
        %v1281 = vtanh.pop %v1271
        %v1282 = vtanh.pop %v1276
        %v1283 = vld [vmem:[%s11] sm:$0x1]
        %v1284 = vld [vmem:[#allocation2] sm:$0x1]
        %1286 = vset.pattern.permute.xlu0 0
        %1287 = vperm.xlu0 %1286, %v1284
        %v1288 = vpop.permute.xlu0 %1287
        %v1290 = vlaneseq
        %v1291 = vshrl.u32 %v1290, 7
        %v1292 = vsub.s32 0, %v1291
        %v1293 = vrot.slane %v1288, %v1292
        %v1295 = vsel %vm794, %v1283, 0
        %1297 = vmatprep.subr.mxu0 0.0
        %1298 = vmatpush1.msra.mxu0 %v1279
        %1299 = vmatprep.subr.mxu0 0.0
        %1300 = vmatpush1.msra.mxu0 %v1280
        %1301 = vmatprep.subr.mxu0 0.0
        %1302 = vmatpush1.msra.mxu0 %v1281
        %1303 = vmatprep.subr.mxu0 0.0
        %1304 = vmatpush1.msra.mxu0 %v1282
        %1305 = vmatprep.subr.mxu0 0.0
        %1306 = vmatpush1.msra.mxu0 0.0
        %1307 = vmatprep.subr.mxu0 0.0
        %1308 = vmatpush1.msra.mxu0 0.0
        %1309 = vmatprep.subr.mxu0 0.0
        %1310 = vmatpush1.msra.mxu0 0.0
        %1311 = vmatprep.subr.mxu0 0.0
        %1312 = vmatpush1.msra.mxu0 0.0
        %1313 = vmatprep.subr.mxu0 0.0
        %1314 = vmatpush1.msra.mxu0 0.0
        %1315 = vmatprep.subr.mxu0 0.0
        %1316 = vmatpush1.msra.mxu0 0.0
        %1317 = vmatprep.subr.mxu0 0.0
        %1318 = vmatpush1.msra.mxu0 0.0
        %1319 = vmatprep.subr.mxu0 0.0
        %1320 = vmatpush1.msra.mxu0 0.0
        %1321 = vmatprep.subr.mxu0 0.0
        %1322 = vmatpush1.msra.mxu0 0.0
        %1323 = vmatprep.subr.mxu0 0.0
        %1324 = vmatpush1.msra.mxu0 0.0
        %1325 = vmatprep.subr.mxu0 0.0
        %1326 = vmatpush1.msra.mxu0 0.0
        %1327 = vmatprep.subr.mxu0 0.0
        %1328 = vmatpush1.msra.mxu0 0.0
        %1329 = vmatprep.subr.mxu0 0.0
        %1330 = vmatpush1.msra.mxu0 0.0
        %1331 = vmatprep.subr.mxu0 0.0
        %1332 = vmatpush1.msra.mxu0 0.0
        %1333 = vmatprep.subr.mxu0 0.0
        %1334 = vmatpush1.msra.mxu0 0.0
        %1335 = vmatprep.subr.mxu0 0.0
        %1336 = vmatpush1.msra.mxu0 0.0
        %1337 = vmatprep.subr.mxu0 0.0
        %1338 = vmatpush1.msra.mxu0 0.0
        %1339 = vmatprep.subr.mxu0 0.0
        %1340 = vmatpush1.msra.mxu0 0.0
        %1341 = vmatprep.subr.mxu0 0.0
        %1342 = vmatpush1.msra.mxu0 0.0
        %1343 = vmatprep.subr.mxu0 0.0
        %1344 = vmatpush1.msra.mxu0 0.0
        %1345 = vmatprep.subr.mxu0 0.0
        %1346 = vmatpush1.msra.mxu0 0.0
        %1347 = vmatprep.subr.mxu0 0.0
        %1348 = vmatpush1.msra.mxu0 0.0
        %1349 = vmatprep.subr.mxu0 0.0
        %1350 = vmatpush1.msra.mxu0 0.0
        %1351 = vmatprep.subr.mxu0 0.0
        %1352 = vmatpush1.msra.mxu0 0.0
        %1353 = vmatprep.subr.mxu0 0.0
        %1354 = vmatpush1.msra.mxu0 0.0
        %1355 = vmatprep.subr.mxu0 0.0
        %1356 = vmatpush1.msra.mxu0 0.0
        %1357 = vmatprep.subr.mxu0 0.0
        %1358 = vmatpush1.msra.mxu0 0.0
        %1359 = vmatprep.subr.mxu0 0.0
        %1360 = vmatpush1.msra.mxu0 0.0
        %1361 = vmatprep.mubr.f32.mxu0 0.0
        %1362 = vmatmul.mubr.f32.gmra.mrb[0].mxu0 %v1295
        %v1363 = vpop.f32.mrb[0].mxu0
        %v1364 = vadd.f32 %v1293, %v1363
        %v1365 = vpop.f32.mrb[0].mxu0
        %1366 = vdwg.mxu0
        %1367 = vst [vmem:[%s432] sm:$0x1] %v1364
        %s1368 = sand.u32 %s315, 1
        %s1369 = scalar_lea.sflag [#allocation4], %s1368
        %s1370 = sand.u32 %s315, 1
        %s1371 = scalar_lea.vmem [#allocation3], %s1370
        // Predicated region
        $region73: #{tpu_custom_call.1} parent=71 // pred_check
          %p1372 = pneg %p325
        $region74: #{tpu_custom_call.1} parent=71 // pred_check_branch
          %1374 = sbr.rel (%p1372) target = $region76
        $region75: #{tpu_custom_call.1} parent=71 // pred_region
          %s1376 = ssub.s32 16, 16
          %1377 = vsyncadd %s1369, %s1376
          %s1378 = smul.addr %s29, 16
          %s1379 = scalar_lea.hbm %s13, %s1378
          %s1381 = sshll.u32 %s1371, 4
          %s1382 = int_to_ptr.vmem [resolvable:$true] %s1381
          %1384 = dma.vmem_to_hbm [thread:$0]  %s1382, 16, %s1379, %s1369
        $region76: #{tpu_custom_call.1} parent=71 // pred_fallthru
          _
      $region72: #{tpu_custom_call.1} parent=5 // pred_fallthru
        _
      %p1385 = scmp.le.s32.totalorder 2, %s24
      // Predicated region
      $region77: #{tpu_custom_call.1} parent=5 // pred_check
        %p1386 = pneg %p1385
      $region78: #{tpu_custom_call.1} parent=5 // pred_check_branch
        %1388 = sbr.rel (%p1386) target = $region80
      $region79: #{tpu_custom_call.1} parent=5 // pred_region
        %s1389 = ssub.s32 %s24, 2
        // Predicated region
        $region81: #{tpu_custom_call.1} parent=79 // pred_check
          %p1390 = pneg %p331
        $region82: #{tpu_custom_call.1} parent=79 // pred_check_branch
          %1392 = sbr.rel (%p1390) target = $region84
        $region83: #{tpu_custom_call.1} parent=79 // pred_region
          %s1393 = sand.u32 %s316, 1
          %s1394 = scalar_lea.sflag [#allocation4], %s1393
          %s1395 = sand.u32 %s316, 1
          %s1396 = scalar_lea.vmem [#allocation3], %s1395
          %1397 = dma.done %s1394, 16
        $region84: #{tpu_custom_call.1} parent=79 // pred_fallthru
          _
      $region80: #{tpu_custom_call.1} parent=5 // pred_fallthru
        _
    $region6: #{tpu_custom_call.1} parent=1 // loop_footer
      %s28 = sadd.s32 1, %s24
    $region7: #{tpu_custom_call.1} parent=1 // loop_footer_branch
      %23 = sbr.rel target = $region3
    $region8: #{tpu_custom_call.1} parent=1 // loop_exit
      _
    %1398 = vsyncpa [#allocation4], 1
    %s1399 = scalar_lea.sflag [#allocation4], 1
    %1400 = vsyncpa %s1399, 1

</llo_original>
